<compile_context>
chip_gen: v5e
topology: v5e:2x2
jax: 0.10.0
libtpu: 0.0.40
codegen_flags: <defaults>
</compile_context>

<pallas_src>
import math

import jax
import jax.numpy as jnp
import numpy as np
from jax.experimental import pallas as pl
from jax.experimental.pallas import tpu as pltpu  # noqa: F401  (TPU backend)

# ----------------------------- configuration -----------------------------
B = 2                    # batch
NUM_NODES = 16           # graph nodes (N)
INPUT_DIM = 2            # per-node input dim
NUM_UNITS = 16           # rnn units per node (U)
MAX_DIFFUSION_STEP = 2   # K
NUM_SUPPORTS = 2         # e.g. dual random walk
C = INPUT_DIM + NUM_UNITS                              # concat(input, state) feature dim
NUM_MATRICES = NUM_SUPPORTS * MAX_DIFFUSION_STEP + 1   # M
BN = B * NUM_NODES                                     # batch folded onto sublanes

DTYPE = jnp.float32

# leading-axis indices of the stacked weight / bias operands
_GATE_R, _GATE_U, _CAND = 0, 1, 2


# ------------------------------- kernel ---------------------------------
def dcgru_fused_kernel(x_ref, h_ref, t_ref, wx_ref, wh_ref, b_ref, out_ref):
    """Fused DCGRU cell, whole batch folded onto the sublane axis.

    x_ref   : (B*N, INPUT_DIM)       node inputs (batch-major rows)
    h_ref   : (B*N, U)               previous hidden state
    t_ref   : (M-1, B*N, B*N)        block-diagonal kron(I_B, T_m), m >= 1
    wx_ref  : (3, M, INPUT_DIM, U)   input-row weight blocks for [r | u | cand]
    wh_ref  : (3, M, U, U)           hidden-row weight blocks for [r | u | cand]
    b_ref   : (3, 1, U)              biases for [r | u | cand]
    out_ref : (B*N, U)               new hidden state
    """
    x = x_ref[...]          # (BN, INPUT_DIM)
    h = h_ref[...]          # (BN, U)

    def gconv(hid, idx):
        # Reassociated diffusion graph conv:
        #   pre = sum_m T_m @ (x @ Wx[idx,m] + hid @ Wh[idx,m]) + b[idx],  T_0 = I
        # No [x, hid] lane concat, no (N, M*C) feature build, no lane slicing.
        pre = (jnp.dot(x, wx_ref[idx, 0], preferred_element_type=jnp.float32)
               + jnp.dot(hid, wh_ref[idx, 0], preferred_element_type=jnp.float32)
               + b_ref[idx])
        for m in range(1, NUM_MATRICES):
            z = (jnp.dot(x, wx_ref[idx, m], preferred_element_type=jnp.float32)
                 + jnp.dot(hid, wh_ref[idx, m], preferred_element_type=jnp.float32))
            pre = pre + jnp.dot(t_ref[m - 1], z, preferred_element_type=jnp.float32)
        return pre

    # r / u gates from separate weight blocks (no sub-128-lane split of a 2U result).
    r = jax.nn.sigmoid(gconv(h, _GATE_R))        # (BN, U)
    u = jax.nn.sigmoid(gconv(h, _GATE_U))        # (BN, U)

    # candidate with reset-gated hidden state, then GRU blend.
    c = jnp.tanh(gconv(r * h, _CAND))            # (BN, U)
    out_ref[...] = u * h + (1.0 - u) * c


# ---------------------------- pallas wrapper -----------------------------
def dcgru_cell_pallas(inputs, hx, t_bd, w_x, w_h, b_stack):
    """Full DCGRUCell.forward (function='gconv').

    inputs: (B, N*INPUT_DIM), hx: (B, N*NUM_UNITS) -> new_state (B, N*NUM_UNITS)
    """
    x = inputs.reshape(BN, INPUT_DIM)     # contiguous: (B, N*I) -> (B*N, I)
    h = hx.reshape(BN, NUM_UNITS)         # contiguous: (B, N*U) -> (B*N, U)

    new_h = pl.pallas_call(
        dcgru_fused_kernel,
        out_shape=jax.ShapeDtypeStruct((BN, NUM_UNITS), DTYPE),
        # No grid: single invocation, whole (tiny) operands VMEM-resident.
    )(x, h, t_bd, w_x, w_h, b_stack)

    return new_h.reshape(B, NUM_NODES * NUM_UNITS)   # free contiguous reshape


# ------------------------- host-side preprocessing ------------------------
def chebyshev_stack(supports):
    """T_m(S) for m >= 1, in reference order [s0:k1..K, s1:k1..K, ...] -> (M-1, N, N)."""
    eye = jnp.eye(NUM_NODES, dtype=DTYPE)
    mats = []
    for si in range(NUM_SUPPORTS):
        s_mat = supports[si]
        t_prev, t_cur = eye, s_mat            # T_0 = I, T_1 = S
        mats.append(t_cur)
        for _k in range(2, MAX_DIFFUSION_STEP + 1):
            t_next = 2.0 * jnp.matmul(
                s_mat, t_cur, precision=jax.lax.Precision.HIGHEST) - t_prev
            mats.append(t_next)
            t_prev, t_cur = t_cur, t_next
    return jnp.stack(mats, axis=0)            # (M-1, N, N)


def block_diag_stack(t_stack):
    """(M-1, N, N) -> (M-1, B*N, B*N) block-diagonal kron(I_B, T_m)."""
    eye_b = jnp.eye(B, dtype=DTYPE)
    return jax.vmap(lambda t: jnp.kron(eye_b, t))(t_stack)


def repack_weights(w_ru, w_c):
    """Repack PyTorch gconv weights (row index c*M + m) into per-matrix blocks.

    Returns:
      w_x: (3, M, INPUT_DIM, U)  input-row blocks for [r | u | candidate]
      w_h: (3, M, U, U)          hidden-row blocks for [r | u | candidate]
    """
    # TODO(synk): row order assumes the PyTorch gconv layout c*NUM_MATRICES + m
    # (as produced by the reference permute/reshape); verify against real
    # checkpoints before loading trained weights.
    ru_blocks = jnp.transpose(
        w_ru.reshape(C, NUM_MATRICES, 2 * NUM_UNITS), (1, 0, 2))   # (M, C, 2U)
    c_blocks = jnp.transpose(
        w_c.reshape(C, NUM_MATRICES, NUM_UNITS), (1, 0, 2))        # (M, C, U)
    wr = ru_blocks[..., :NUM_UNITS]                                # (M, C, U)
    wu = ru_blocks[..., NUM_UNITS:]                                # (M, C, U)
    w_x = jnp.stack(
        [wr[:, :INPUT_DIM], wu[:, :INPUT_DIM], c_blocks[:, :INPUT_DIM]], axis=0)
    w_h = jnp.stack(
        [wr[:, INPUT_DIM:], wu[:, INPUT_DIM:], c_blocks[:, INPUT_DIM:]], axis=0)
    return w_x, w_h


def pack_biases(b_ru, b_c):
    """Biases for [r | u | candidate] -> (3, 1, U)."""
    return jnp.stack([b_ru[:NUM_UNITS].reshape(1, NUM_UNITS),
                      b_ru[NUM_UNITS:].reshape(1, NUM_UNITS),
                      b_c.reshape(1, NUM_UNITS)], axis=0)


# ------------------------- pure-JAX reference -----------------------------
def _gconv_ref(x_in, state, supports, weights, biases):
    b_, n, _ = x_in.shape
    x0 = jnp.concatenate([x_in, state], axis=2)      # (B, N, C)
    cdim = x0.shape[2]
    x = x0[None]                                     # (1, B, N, C)
    for si in range(NUM_SUPPORTS):
        s_mat = supports[si]
        xk0 = x0
        xk1 = jnp.einsum("nm,bmc->bnc", s_mat, xk0,
                         precision=jax.lax.Precision.HIGHEST)
        x = jnp.concatenate([x, xk1[None]], axis=0)
        for _k in range(2, MAX_DIFFUSION_STEP + 1):
            xk2 = 2.0 * jnp.einsum("nm,bmc->bnc", s_mat, xk1,
                                   precision=jax.lax.Precision.HIGHEST) - xk0
            x = jnp.concatenate([x, xk2[None]], axis=0)
            xk1, xk0 = xk2, xk1
    m = x.shape[0]
    x = jnp.transpose(x, (1, 2, 3, 0)).reshape(b_ * n, cdim * m)
    out = jnp.matmul(x, weights, precision=jax.lax.Precision.HIGHEST) + biases
    return out.reshape(b_, n * weights.shape[1])


def dcgru_cell_ref(inputs, hx, supports, w_ru, b_ru, w_c, b_c):
    x_in = inputs.reshape(B, NUM_NODES, INPUT_DIM)
    h = hx.reshape(B, NUM_NODES, NUM_UNITS)
    value = jax.nn.sigmoid(_gconv_ref(x_in, h, supports, w_ru, b_ru))
    value = value.reshape(B, NUM_NODES, 2 * NUM_UNITS)
    r = value[..., :NUM_UNITS].reshape(B, NUM_NODES * NUM_UNITS)
    u = value[..., NUM_UNITS:].reshape(B, NUM_NODES * NUM_UNITS)
    c = _gconv_ref(x_in, (r * hx).reshape(B, NUM_NODES, NUM_UNITS),
                   supports, w_c, b_c)
    c = jnp.tanh(c)
    return u * hx + (1.0 - u) * c


# --------------------------------- main ------------------------------------
def _xavier_normal(key, shape):
    fan_in, fan_out = shape
    std = math.sqrt(2.0 / (fan_in + fan_out))
    return (jax.random.normal(key, shape, dtype=jnp.float32) * std).astype(DTYPE)


if __name__ == "__main__":
    key = jax.random.PRNGKey(0)
    k_in, k_h, k_s, k_w1, k_w2 = jax.random.split(key, 5)

    inputs = jax.random.normal(k_in, (B, NUM_NODES * INPUT_DIM), dtype=DTYPE)
    hx = jax.random.normal(k_h, (B, NUM_NODES * NUM_UNITS), dtype=DTYPE)

    # Deterministic synthetic "random walk" supports: row-normalized random matrices.
    adj = jax.random.uniform(k_s, (NUM_SUPPORTS, NUM_NODES, NUM_NODES), dtype=DTYPE)
    supports = adj / jnp.sum(adj, axis=-1, keepdims=True)

    # Parameters (PyTorch layout: xavier_normal weights, constant biases).
    w_ru = _xavier_normal(k_w1, (C * NUM_MATRICES, 2 * NUM_UNITS))
    b_ru = jnp.full((2 * NUM_UNITS,), 1.0, dtype=DTYPE)   # bias_start=1.0 for gates
    w_c = _xavier_normal(k_w2, (C * NUM_MATRICES, NUM_UNITS))
    b_c = jnp.zeros((NUM_UNITS,), dtype=DTYPE)            # bias_start=0.0 for candidate

    # Host-side prep (static across the sequence for a fixed graph / checkpoint).
    t_bd = block_diag_stack(chebyshev_stack(supports))    # (M-1, B*N, B*N)
    w_x, w_h = repack_weights(w_ru, w_c)                  # (3,M,2,U), (3,M,U,U)
    b_stack = pack_biases(b_ru, b_c)                      # (3, 1, U)

    new_state = jax.block_until_ready(
        dcgru_cell_pallas(inputs, hx, t_bd, w_x, w_h, b_stack))
    ref = jax.block_until_ready(
        dcgru_cell_ref(inputs, hx, supports, w_ru, b_ru, w_c, b_c))

    np.testing.assert_allclose(
        np.asarray(new_state), np.asarray(ref), rtol=1e-4, atol=1e-4
    )
    print("KERNEL_OK")
</pallas_src>

<mosaic_0001>
module attributes {stable_mosaic.version = 11 : i64} {
  func.func @dcgru_fused_kernel(%arg0: memref<32x2xf32, #tpu.memory_space<vmem>>, %arg1: memref<32x16xf32, #tpu.memory_space<vmem>>, %arg2: memref<4x32x32xf32, #tpu.memory_space<vmem>>, %arg3: memref<3x5x2x16xf32, #tpu.memory_space<vmem>>, %arg4: memref<3x5x16x16xf32, #tpu.memory_space<vmem>>, %arg5: memref<3x1x16xf32, #tpu.memory_space<vmem>>, %arg6: memref<32x16xf32, #tpu.memory_space<vmem>>) attributes {dimension_semantics = [], scalar_prefetch = 0 : i64, scratch_operands = 0 : i64, tpu.core_type = #tpu.core_type<tc>} {
    %c0 = arith.constant 0 : index
    %c0_0 = arith.constant 0 : index
    %0 = vector.load %arg0[%c0, %c0_0] : memref<32x2xf32, #tpu.memory_space<vmem>>, vector<32x2xf32>
    %c0_1 = arith.constant 0 : index
    %c0_2 = arith.constant 0 : index
    %1 = vector.load %arg1[%c0_1, %c0_2] : memref<32x16xf32, #tpu.memory_space<vmem>>, vector<32x16xf32>
    %c0_3 = arith.constant 0 : index
    %c0_4 = arith.constant 0 : index
    %c0_5 = arith.constant 0 : index
    %c0_6 = arith.constant 0 : index
    %2 = vector.load %arg3[%c0_3, %c0_4, %c0_5, %c0_6] : memref<3x5x2x16xf32, #tpu.memory_space<vmem>>, vector<1x1x2x16xf32>
    %3 = vector.shape_cast %2 : vector<1x1x2x16xf32> to vector<2x16xf32>
    %cst = arith.constant dense<0.000000e+00> : vector<32x16xf32>
    %4 = tpu.matmul %0, %3, %cst {dimension_numbers = #tpu.dot_dimension_numbers<[1], [0], [0], [1], [0, 0, 1, 1], [], []>} : vector<32x2xf32>, vector<2x16xf32>, vector<32x16xf32> -> vector<32x16xf32>
    %c0_7 = arith.constant 0 : index
    %c0_8 = arith.constant 0 : index
    %c0_9 = arith.constant 0 : index
    %c0_10 = arith.constant 0 : index
    %5 = vector.load %arg4[%c0_7, %c0_8, %c0_9, %c0_10] : memref<3x5x16x16xf32, #tpu.memory_space<vmem>>, vector<1x1x16x16xf32>
    %6 = vector.shape_cast %5 : vector<1x1x16x16xf32> to vector<16x16xf32>
    %cst_11 = arith.constant dense<0.000000e+00> : vector<32x16xf32>
    %7 = tpu.matmul %1, %6, %cst_11 {dimension_numbers = #tpu.dot_dimension_numbers<[1], [0], [0], [1], [0, 0, 1, 1], [], []>} : vector<32x16xf32>, vector<16x16xf32>, vector<32x16xf32> -> vector<32x16xf32>
    %8 = arith.addf %4, %7 : vector<32x16xf32>
    %c0_12 = arith.constant 0 : index
    %c0_13 = arith.constant 0 : index
    %c0_14 = arith.constant 0 : index
    %9 = vector.load %arg5[%c0_12, %c0_13, %c0_14] : memref<3x1x16xf32, #tpu.memory_space<vmem>>, vector<1x1x16xf32>
    %10 = vector.shape_cast %9 : vector<1x1x16xf32> to vector<1x16xf32>
    %11 = vector.broadcast %10 : vector<1x16xf32> to vector<32x16xf32>
    %12 = arith.addf %8, %11 : vector<32x16xf32>
    %c0_15 = arith.constant 0 : index
    %c1 = arith.constant 1 : index
    %c0_16 = arith.constant 0 : index
    %c0_17 = arith.constant 0 : index
    %13 = vector.load %arg3[%c0_15, %c1, %c0_16, %c0_17] : memref<3x5x2x16xf32, #tpu.memory_space<vmem>>, vector<1x1x2x16xf32>
    %14 = vector.shape_cast %13 : vector<1x1x2x16xf32> to vector<2x16xf32>
    %cst_18 = arith.constant dense<0.000000e+00> : vector<32x16xf32>
    %15 = tpu.matmul %0, %14, %cst_18 {dimension_numbers = #tpu.dot_dimension_numbers<[1], [0], [0], [1], [0, 0, 1, 1], [], []>} : vector<32x2xf32>, vector<2x16xf32>, vector<32x16xf32> -> vector<32x16xf32>
    %c0_19 = arith.constant 0 : index
    %c1_20 = arith.constant 1 : index
    %c0_21 = arith.constant 0 : index
    %c0_22 = arith.constant 0 : index
    %16 = vector.load %arg4[%c0_19, %c1_20, %c0_21, %c0_22] : memref<3x5x16x16xf32, #tpu.memory_space<vmem>>, vector<1x1x16x16xf32>
    %17 = vector.shape_cast %16 : vector<1x1x16x16xf32> to vector<16x16xf32>
    %cst_23 = arith.constant dense<0.000000e+00> : vector<32x16xf32>
    %18 = tpu.matmul %1, %17, %cst_23 {dimension_numbers = #tpu.dot_dimension_numbers<[1], [0], [0], [1], [0, 0, 1, 1], [], []>} : vector<32x16xf32>, vector<16x16xf32>, vector<32x16xf32> -> vector<32x16xf32>
    %19 = arith.addf %15, %18 : vector<32x16xf32>
    %c0_24 = arith.constant 0 : index
    %c0_25 = arith.constant 0 : index
    %c0_26 = arith.constant 0 : index
    %20 = vector.load %arg2[%c0_24, %c0_25, %c0_26] : memref<4x32x32xf32, #tpu.memory_space<vmem>>, vector<1x32x32xf32>
    %21 = vector.shape_cast %20 : vector<1x32x32xf32> to vector<32x32xf32>
    %cst_27 = arith.constant dense<0.000000e+00> : vector<32x16xf32>
    %22 = tpu.matmul %21, %19, %cst_27 {dimension_numbers = #tpu.dot_dimension_numbers<[1], [0], [0], [1], [0, 0, 1, 1], [], []>} : vector<32x32xf32>, vector<32x16xf32>, vector<32x16xf32> -> vector<32x16xf32>
    %23 = arith.addf %12, %22 : vector<32x16xf32>
    %c0_28 = arith.constant 0 : index
    %c2 = arith.constant 2 : index
    %c0_29 = arith.constant 0 : index
    %c0_30 = arith.constant 0 : index
    %24 = vector.load %arg3[%c0_28, %c2, %c0_29, %c0_30] : memref<3x5x2x16xf32, #tpu.memory_space<vmem>>, vector<1x1x2x16xf32>
    %25 = vector.shape_cast %24 : vector<1x1x2x16xf32> to vector<2x16xf32>
    %cst_31 = arith.constant dense<0.000000e+00> : vector<32x16xf32>
    %26 = tpu.matmul %0, %25, %cst_31 {dimension_numbers = #tpu.dot_dimension_numbers<[1], [0], [0], [1], [0, 0, 1, 1], [], []>} : vector<32x2xf32>, vector<2x16xf32>, vector<32x16xf32> -> vector<32x16xf32>
    %c0_32 = arith.constant 0 : index
    %c2_33 = arith.constant 2 : index
    %c0_34 = arith.constant 0 : index
    %c0_35 = arith.constant 0 : index
    %27 = vector.load %arg4[%c0_32, %c2_33, %c0_34, %c0_35] : memref<3x5x16x16xf32, #tpu.memory_space<vmem>>, vector<1x1x16x16xf32>
    %28 = vector.shape_cast %27 : vector<1x1x16x16xf32> to vector<16x16xf32>
    %cst_36 = arith.constant dense<0.000000e+00> : vector<32x16xf32>
    %29 = tpu.matmul %1, %28, %cst_36 {dimension_numbers = #tpu.dot_dimension_numbers<[1], [0], [0], [1], [0, 0, 1, 1], [], []>} : vector<32x16xf32>, vector<16x16xf32>, vector<32x16xf32> -> vector<32x16xf32>
    %30 = arith.addf %26, %29 : vector<32x16xf32>
    %c1_37 = arith.constant 1 : index
    %c0_38 = arith.constant 0 : index
    %c0_39 = arith.constant 0 : index
    %31 = vector.load %arg2[%c1_37, %c0_38, %c0_39] : memref<4x32x32xf32, #tpu.memory_space<vmem>>, vector<1x32x32xf32>
    %32 = vector.shape_cast %31 : vector<1x32x32xf32> to vector<32x32xf32>
    %cst_40 = arith.constant dense<0.000000e+00> : vector<32x16xf32>
    %33 = tpu.matmul %32, %30, %cst_40 {dimension_numbers = #tpu.dot_dimension_numbers<[1], [0], [0], [1], [0, 0, 1, 1], [], []>} : vector<32x32xf32>, vector<32x16xf32>, vector<32x16xf32> -> vector<32x16xf32>
    %34 = arith.addf %23, %33 : vector<32x16xf32>
    %c0_41 = arith.constant 0 : index
    %c3 = arith.constant 3 : index
    %c0_42 = arith.constant 0 : index
    %c0_43 = arith.constant 0 : index
    %35 = vector.load %arg3[%c0_41, %c3, %c0_42, %c0_43] : memref<3x5x2x16xf32, #tpu.memory_space<vmem>>, vector<1x1x2x16xf32>
    %36 = vector.shape_cast %35 : vector<1x1x2x16xf32> to vector<2x16xf32>
    %cst_44 = arith.constant dense<0.000000e+00> : vector<32x16xf32>
    %37 = tpu.matmul %0, %36, %cst_44 {dimension_numbers = #tpu.dot_dimension_numbers<[1], [0], [0], [1], [0, 0, 1, 1], [], []>} : vector<32x2xf32>, vector<2x16xf32>, vector<32x16xf32> -> vector<32x16xf32>
    %c0_45 = arith.constant 0 : index
    %c3_46 = arith.constant 3 : index
    %c0_47 = arith.constant 0 : index
    %c0_48 = arith.constant 0 : index
    %38 = vector.load %arg4[%c0_45, %c3_46, %c0_47, %c0_48] : memref<3x5x16x16xf32, #tpu.memory_space<vmem>>, vector<1x1x16x16xf32>
    %39 = vector.shape_cast %38 : vector<1x1x16x16xf32> to vector<16x16xf32>
    %cst_49 = arith.constant dense<0.000000e+00> : vector<32x16xf32>
    %40 = tpu.matmul %1, %39, %cst_49 {dimension_numbers = #tpu.dot_dimension_numbers<[1], [0], [0], [1], [0, 0, 1, 1], [], []>} : vector<32x16xf32>, vector<16x16xf32>, vector<32x16xf32> -> vector<32x16xf32>
    %41 = arith.addf %37, %40 : vector<32x16xf32>
    %c2_50 = arith.constant 2 : index
    %c0_51 = arith.constant 0 : index
    %c0_52 = arith.constant 0 : index
    %42 = vector.load %arg2[%c2_50, %c0_51, %c0_52] : memref<4x32x32xf32, #tpu.memory_space<vmem>>, vector<1x32x32xf32>
    %43 = vector.shape_cast %42 : vector<1x32x32xf32> to vector<32x32xf32>
    %cst_53 = arith.constant dense<0.000000e+00> : vector<32x16xf32>
    %44 = tpu.matmul %43, %41, %cst_53 {dimension_numbers = #tpu.dot_dimension_numbers<[1], [0], [0], [1], [0, 0, 1, 1], [], []>} : vector<32x32xf32>, vector<32x16xf32>, vector<32x16xf32> -> vector<32x16xf32>
    %45 = arith.addf %34, %44 : vector<32x16xf32>
    %c0_54 = arith.constant 0 : index
    %c4 = arith.constant 4 : index
    %c0_55 = arith.constant 0 : index
    %c0_56 = arith.constant 0 : index
    %46 = vector.load %arg3[%c0_54, %c4, %c0_55, %c0_56] : memref<3x5x2x16xf32, #tpu.memory_space<vmem>>, vector<1x1x2x16xf32>
    %47 = vector.shape_cast %46 : vector<1x1x2x16xf32> to vector<2x16xf32>
    %cst_57 = arith.constant dense<0.000000e+00> : vector<32x16xf32>
    %48 = tpu.matmul %0, %47, %cst_57 {dimension_numbers = #tpu.dot_dimension_numbers<[1], [0], [0], [1], [0, 0, 1, 1], [], []>} : vector<32x2xf32>, vector<2x16xf32>, vector<32x16xf32> -> vector<32x16xf32>
    %c0_58 = arith.constant 0 : index
    %c4_59 = arith.constant 4 : index
    %c0_60 = arith.constant 0 : index
    %c0_61 = arith.constant 0 : index
    %49 = vector.load %arg4[%c0_58, %c4_59, %c0_60, %c0_61] : memref<3x5x16x16xf32, #tpu.memory_space<vmem>>, vector<1x1x16x16xf32>
    %50 = vector.shape_cast %49 : vector<1x1x16x16xf32> to vector<16x16xf32>
    %cst_62 = arith.constant dense<0.000000e+00> : vector<32x16xf32>
    %51 = tpu.matmul %1, %50, %cst_62 {dimension_numbers = #tpu.dot_dimension_numbers<[1], [0], [0], [1], [0, 0, 1, 1], [], []>} : vector<32x16xf32>, vector<16x16xf32>, vector<32x16xf32> -> vector<32x16xf32>
    %52 = arith.addf %48, %51 : vector<32x16xf32>
    %c3_63 = arith.constant 3 : index
    %c0_64 = arith.constant 0 : index
    %c0_65 = arith.constant 0 : index
    %53 = vector.load %arg2[%c3_63, %c0_64, %c0_65] : memref<4x32x32xf32, #tpu.memory_space<vmem>>, vector<1x32x32xf32>
    %54 = vector.shape_cast %53 : vector<1x32x32xf32> to vector<32x32xf32>
    %cst_66 = arith.constant dense<0.000000e+00> : vector<32x16xf32>
    %55 = tpu.matmul %54, %52, %cst_66 {dimension_numbers = #tpu.dot_dimension_numbers<[1], [0], [0], [1], [0, 0, 1, 1], [], []>} : vector<32x32xf32>, vector<32x16xf32>, vector<32x16xf32> -> vector<32x16xf32>
    %56 = arith.addf %45, %55 : vector<32x16xf32>
    %57 = arith.negf %56 : vector<32x16xf32>
    %58 = math.exp %57 : vector<32x16xf32>
    %cst_67 = arith.constant 1.000000e+00 : f32
    %59 = vector.broadcast %cst_67 : f32 to vector<32x16xf32>
    %60 = arith.addf %59, %58 : vector<32x16xf32>
    %61 = arith.divf %59, %60 : vector<32x16xf32>
    %c1_68 = arith.constant 1 : index
    %c0_69 = arith.constant 0 : index
    %c0_70 = arith.constant 0 : index
    %c0_71 = arith.constant 0 : index
    %62 = vector.load %arg3[%c1_68, %c0_69, %c0_70, %c0_71] : memref<3x5x2x16xf32, #tpu.memory_space<vmem>>, vector<1x1x2x16xf32>
    %63 = vector.shape_cast %62 : vector<1x1x2x16xf32> to vector<2x16xf32>
    %cst_72 = arith.constant dense<0.000000e+00> : vector<32x16xf32>
    %64 = tpu.matmul %0, %63, %cst_72 {dimension_numbers = #tpu.dot_dimension_numbers<[1], [0], [0], [1], [0, 0, 1, 1], [], []>} : vector<32x2xf32>, vector<2x16xf32>, vector<32x16xf32> -> vector<32x16xf32>
    %c1_73 = arith.constant 1 : index
    %c0_74 = arith.constant 0 : index
    %c0_75 = arith.constant 0 : index
    %c0_76 = arith.constant 0 : index
    %65 = vector.load %arg4[%c1_73, %c0_74, %c0_75, %c0_76] : memref<3x5x16x16xf32, #tpu.memory_space<vmem>>, vector<1x1x16x16xf32>
    %66 = vector.shape_cast %65 : vector<1x1x16x16xf32> to vector<16x16xf32>
    %cst_77 = arith.constant dense<0.000000e+00> : vector<32x16xf32>
    %67 = tpu.matmul %1, %66, %cst_77 {dimension_numbers = #tpu.dot_dimension_numbers<[1], [0], [0], [1], [0, 0, 1, 1], [], []>} : vector<32x16xf32>, vector<16x16xf32>, vector<32x16xf32> -> vector<32x16xf32>
    %68 = arith.addf %64, %67 : vector<32x16xf32>
    %c1_78 = arith.constant 1 : index
    %c0_79 = arith.constant 0 : index
    %c0_80 = arith.constant 0 : index
    %69 = vector.load %arg5[%c1_78, %c0_79, %c0_80] : memref<3x1x16xf32, #tpu.memory_space<vmem>>, vector<1x1x16xf32>
    %70 = vector.shape_cast %69 : vector<1x1x16xf32> to vector<1x16xf32>
    %71 = vector.broadcast %70 : vector<1x16xf32> to vector<32x16xf32>
    %72 = arith.addf %68, %71 : vector<32x16xf32>
    %c1_81 = arith.constant 1 : index
    %c1_82 = arith.constant 1 : index
    %c0_83 = arith.constant 0 : index
    %c0_84 = arith.constant 0 : index
    %73 = vector.load %arg3[%c1_81, %c1_82, %c0_83, %c0_84] : memref<3x5x2x16xf32, #tpu.memory_space<vmem>>, vector<1x1x2x16xf32>
    %74 = vector.shape_cast %73 : vector<1x1x2x16xf32> to vector<2x16xf32>
    %cst_85 = arith.constant dense<0.000000e+00> : vector<32x16xf32>
    %75 = tpu.matmul %0, %74, %cst_85 {dimension_numbers = #tpu.dot_dimension_numbers<[1], [0], [0], [1], [0, 0, 1, 1], [], []>} : vector<32x2xf32>, vector<2x16xf32>, vector<32x16xf32> -> vector<32x16xf32>
    %c1_86 = arith.constant 1 : index
    %c1_87 = arith.constant 1 : index
    %c0_88 = arith.constant 0 : index
    %c0_89 = arith.constant 0 : index
    %76 = vector.load %arg4[%c1_86, %c1_87, %c0_88, %c0_89] : memref<3x5x16x16xf32, #tpu.memory_space<vmem>>, vector<1x1x16x16xf32>
    %77 = vector.shape_cast %76 : vector<1x1x16x16xf32> to vector<16x16xf32>
    %cst_90 = arith.constant dense<0.000000e+00> : vector<32x16xf32>
    %78 = tpu.matmul %1, %77, %cst_90 {dimension_numbers = #tpu.dot_dimension_numbers<[1], [0], [0], [1], [0, 0, 1, 1], [], []>} : vector<32x16xf32>, vector<16x16xf32>, vector<32x16xf32> -> vector<32x16xf32>
    %79 = arith.addf %75, %78 : vector<32x16xf32>
    %c0_91 = arith.constant 0 : index
    %c0_92 = arith.constant 0 : index
    %c0_93 = arith.constant 0 : index
    %80 = vector.load %arg2[%c0_91, %c0_92, %c0_93] : memref<4x32x32xf32, #tpu.memory_space<vmem>>, vector<1x32x32xf32>
    %81 = vector.shape_cast %80 : vector<1x32x32xf32> to vector<32x32xf32>
    %cst_94 = arith.constant dense<0.000000e+00> : vector<32x16xf32>
    %82 = tpu.matmul %81, %79, %cst_94 {dimension_numbers = #tpu.dot_dimension_numbers<[1], [0], [0], [1], [0, 0, 1, 1], [], []>} : vector<32x32xf32>, vector<32x16xf32>, vector<32x16xf32> -> vector<32x16xf32>
    %83 = arith.addf %72, %82 : vector<32x16xf32>
    %c1_95 = arith.constant 1 : index
    %c2_96 = arith.constant 2 : index
    %c0_97 = arith.constant 0 : index
    %c0_98 = arith.constant 0 : index
    %84 = vector.load %arg3[%c1_95, %c2_96, %c0_97, %c0_98] : memref<3x5x2x16xf32, #tpu.memory_space<vmem>>, vector<1x1x2x16xf32>
    %85 = vector.shape_cast %84 : vector<1x1x2x16xf32> to vector<2x16xf32>
    %cst_99 = arith.constant dense<0.000000e+00> : vector<32x16xf32>
    %86 = tpu.matmul %0, %85, %cst_99 {dimension_numbers = #tpu.dot_dimension_numbers<[1], [0], [0], [1], [0, 0, 1, 1], [], []>} : vector<32x2xf32>, vector<2x16xf32>, vector<32x16xf32> -> vector<32x16xf32>
    %c1_100 = arith.constant 1 : index
    %c2_101 = arith.constant 2 : index
    %c0_102 = arith.constant 0 : index
    %c0_103 = arith.constant 0 : index
    %87 = vector.load %arg4[%c1_100, %c2_101, %c0_102, %c0_103] : memref<3x5x16x16xf32, #tpu.memory_space<vmem>>, vector<1x1x16x16xf32>
    %88 = vector.shape_cast %87 : vector<1x1x16x16xf32> to vector<16x16xf32>
    %cst_104 = arith.constant dense<0.000000e+00> : vector<32x16xf32>
    %89 = tpu.matmul %1, %88, %cst_104 {dimension_numbers = #tpu.dot_dimension_numbers<[1], [0], [0], [1], [0, 0, 1, 1], [], []>} : vector<32x16xf32>, vector<16x16xf32>, vector<32x16xf32> -> vector<32x16xf32>
    %90 = arith.addf %86, %89 : vector<32x16xf32>
    %c1_105 = arith.constant 1 : index
    %c0_106 = arith.constant 0 : index
    %c0_107 = arith.constant 0 : index
    %91 = vector.load %arg2[%c1_105, %c0_106, %c0_107] : memref<4x32x32xf32, #tpu.memory_space<vmem>>, vector<1x32x32xf32>
    %92 = vector.shape_cast %91 : vector<1x32x32xf32> to vector<32x32xf32>
    %cst_108 = arith.constant dense<0.000000e+00> : vector<32x16xf32>
    %93 = tpu.matmul %92, %90, %cst_108 {dimension_numbers = #tpu.dot_dimension_numbers<[1], [0], [0], [1], [0, 0, 1, 1], [], []>} : vector<32x32xf32>, vector<32x16xf32>, vector<32x16xf32> -> vector<32x16xf32>
    %94 = arith.addf %83, %93 : vector<32x16xf32>
    %c1_109 = arith.constant 1 : index
    %c3_110 = arith.constant 3 : index
    %c0_111 = arith.constant 0 : index
    %c0_112 = arith.constant 0 : index
    %95 = vector.load %arg3[%c1_109, %c3_110, %c0_111, %c0_112] : memref<3x5x2x16xf32, #tpu.memory_space<vmem>>, vector<1x1x2x16xf32>
    %96 = vector.shape_cast %95 : vector<1x1x2x16xf32> to vector<2x16xf32>
    %cst_113 = arith.constant dense<0.000000e+00> : vector<32x16xf32>
    %97 = tpu.matmul %0, %96, %cst_113 {dimension_numbers = #tpu.dot_dimension_numbers<[1], [0], [0], [1], [0, 0, 1, 1], [], []>} : vector<32x2xf32>, vector<2x16xf32>, vector<32x16xf32> -> vector<32x16xf32>
    %c1_114 = arith.constant 1 : index
    %c3_115 = arith.constant 3 : index
    %c0_116 = arith.constant 0 : index
    %c0_117 = arith.constant 0 : index
    %98 = vector.load %arg4[%c1_114, %c3_115, %c0_116, %c0_117] : memref<3x5x16x16xf32, #tpu.memory_space<vmem>>, vector<1x1x16x16xf32>
    %99 = vector.shape_cast %98 : vector<1x1x16x16xf32> to vector<16x16xf32>
    %cst_118 = arith.constant dense<0.000000e+00> : vector<32x16xf32>
    %100 = tpu.matmul %1, %99, %cst_118 {dimension_numbers = #tpu.dot_dimension_numbers<[1], [0], [0], [1], [0, 0, 1, 1], [], []>} : vector<32x16xf32>, vector<16x16xf32>, vector<32x16xf32> -> vector<32x16xf32>
    %101 = arith.addf %97, %100 : vector<32x16xf32>
    %c2_119 = arith.constant 2 : index
    %c0_120 = arith.constant 0 : index
    %c0_121 = arith.constant 0 : index
    %102 = vector.load %arg2[%c2_119, %c0_120, %c0_121] : memref<4x32x32xf32, #tpu.memory_space<vmem>>, vector<1x32x32xf32>
    %103 = vector.shape_cast %102 : vector<1x32x32xf32> to vector<32x32xf32>
    %cst_122 = arith.constant dense<0.000000e+00> : vector<32x16xf32>
    %104 = tpu.matmul %103, %101, %cst_122 {dimension_numbers = #tpu.dot_dimension_numbers<[1], [0], [0], [1], [0, 0, 1, 1], [], []>} : vector<32x32xf32>, vector<32x16xf32>, vector<32x16xf32> -> vector<32x16xf32>
    %105 = arith.addf %94, %104 : vector<32x16xf32>
    %c1_123 = arith.constant 1 : index
    %c4_124 = arith.constant 4 : index
    %c0_125 = arith.constant 0 : index
    %c0_126 = arith.constant 0 : index
    %106 = vector.load %arg3[%c1_123, %c4_124, %c0_125, %c0_126] : memref<3x5x2x16xf32, #tpu.memory_space<vmem>>, vector<1x1x2x16xf32>
    %107 = vector.shape_cast %106 : vector<1x1x2x16xf32> to vector<2x16xf32>
    %cst_127 = arith.constant dense<0.000000e+00> : vector<32x16xf32>
    %108 = tpu.matmul %0, %107, %cst_127 {dimension_numbers = #tpu.dot_dimension_numbers<[1], [0], [0], [1], [0, 0, 1, 1], [], []>} : vector<32x2xf32>, vector<2x16xf32>, vector<32x16xf32> -> vector<32x16xf32>
    %c1_128 = arith.constant 1 : index
    %c4_129 = arith.constant 4 : index
    %c0_130 = arith.constant 0 : index
    %c0_131 = arith.constant 0 : index
    %109 = vector.load %arg4[%c1_128, %c4_129, %c0_130, %c0_131] : memref<3x5x16x16xf32, #tpu.memory_space<vmem>>, vector<1x1x16x16xf32>
    %110 = vector.shape_cast %109 : vector<1x1x16x16xf32> to vector<16x16xf32>
    %cst_132 = arith.constant dense<0.000000e+00> : vector<32x16xf32>
    %111 = tpu.matmul %1, %110, %cst_132 {dimension_numbers = #tpu.dot_dimension_numbers<[1], [0], [0], [1], [0, 0, 1, 1], [], []>} : vector<32x16xf32>, vector<16x16xf32>, vector<32x16xf32> -> vector<32x16xf32>
    %112 = arith.addf %108, %111 : vector<32x16xf32>
    %c3_133 = arith.constant 3 : index
    %c0_134 = arith.constant 0 : index
    %c0_135 = arith.constant 0 : index
    %113 = vector.load %arg2[%c3_133, %c0_134, %c0_135] : memref<4x32x32xf32, #tpu.memory_space<vmem>>, vector<1x32x32xf32>
    %114 = vector.shape_cast %113 : vector<1x32x32xf32> to vector<32x32xf32>
    %cst_136 = arith.constant dense<0.000000e+00> : vector<32x16xf32>
    %115 = tpu.matmul %114, %112, %cst_136 {dimension_numbers = #tpu.dot_dimension_numbers<[1], [0], [0], [1], [0, 0, 1, 1], [], []>} : vector<32x32xf32>, vector<32x16xf32>, vector<32x16xf32> -> vector<32x16xf32>
    %116 = arith.addf %105, %115 : vector<32x16xf32>
    %117 = arith.negf %116 : vector<32x16xf32>
    %118 = math.exp %117 : vector<32x16xf32>
    %cst_137 = arith.constant 1.000000e+00 : f32
    %119 = vector.broadcast %cst_137 : f32 to vector<32x16xf32>
    %120 = arith.addf %119, %118 : vector<32x16xf32>
    %121 = arith.divf %119, %120 : vector<32x16xf32>
    %122 = arith.mulf %61, %1 : vector<32x16xf32>
    %c2_138 = arith.constant 2 : index
    %c0_139 = arith.constant 0 : index
    %c0_140 = arith.constant 0 : index
    %c0_141 = arith.constant 0 : index
    %123 = vector.load %arg3[%c2_138, %c0_139, %c0_140, %c0_141] : memref<3x5x2x16xf32, #tpu.memory_space<vmem>>, vector<1x1x2x16xf32>
    %124 = vector.shape_cast %123 : vector<1x1x2x16xf32> to vector<2x16xf32>
    %cst_142 = arith.constant dense<0.000000e+00> : vector<32x16xf32>
    %125 = tpu.matmul %0, %124, %cst_142 {dimension_numbers = #tpu.dot_dimension_numbers<[1], [0], [0], [1], [0, 0, 1, 1], [], []>} : vector<32x2xf32>, vector<2x16xf32>, vector<32x16xf32> -> vector<32x16xf32>
    %c2_143 = arith.constant 2 : index
    %c0_144 = arith.constant 0 : index
    %c0_145 = arith.constant 0 : index
    %c0_146 = arith.constant 0 : index
    %126 = vector.load %arg4[%c2_143, %c0_144, %c0_145, %c0_146] : memref<3x5x16x16xf32, #tpu.memory_space<vmem>>, vector<1x1x16x16xf32>
    %127 = vector.shape_cast %126 : vector<1x1x16x16xf32> to vector<16x16xf32>
    %cst_147 = arith.constant dense<0.000000e+00> : vector<32x16xf32>
    %128 = tpu.matmul %122, %127, %cst_147 {dimension_numbers = #tpu.dot_dimension_numbers<[1], [0], [0], [1], [0, 0, 1, 1], [], []>} : vector<32x16xf32>, vector<16x16xf32>, vector<32x16xf32> -> vector<32x16xf32>
    %129 = arith.addf %125, %128 : vector<32x16xf32>
    %c2_148 = arith.constant 2 : index
    %c0_149 = arith.constant 0 : index
    %c0_150 = arith.constant 0 : index
    %130 = vector.load %arg5[%c2_148, %c0_149, %c0_150] : memref<3x1x16xf32, #tpu.memory_space<vmem>>, vector<1x1x16xf32>
    %131 = vector.shape_cast %130 : vector<1x1x16xf32> to vector<1x16xf32>
    %132 = vector.broadcast %131 : vector<1x16xf32> to vector<32x16xf32>
    %133 = arith.addf %129, %132 : vector<32x16xf32>
    %c2_151 = arith.constant 2 : index
    %c1_152 = arith.constant 1 : index
    %c0_153 = arith.constant 0 : index
    %c0_154 = arith.constant 0 : index
    %134 = vector.load %arg3[%c2_151, %c1_152, %c0_153, %c0_154] : memref<3x5x2x16xf32, #tpu.memory_space<vmem>>, vector<1x1x2x16xf32>
    %135 = vector.shape_cast %134 : vector<1x1x2x16xf32> to vector<2x16xf32>
    %cst_155 = arith.constant dense<0.000000e+00> : vector<32x16xf32>
    %136 = tpu.matmul %0, %135, %cst_155 {dimension_numbers = #tpu.dot_dimension_numbers<[1], [0], [0], [1], [0, 0, 1, 1], [], []>} : vector<32x2xf32>, vector<2x16xf32>, vector<32x16xf32> -> vector<32x16xf32>
    %c2_156 = arith.constant 2 : index
    %c1_157 = arith.constant 1 : index
    %c0_158 = arith.constant 0 : index
    %c0_159 = arith.constant 0 : index
    %137 = vector.load %arg4[%c2_156, %c1_157, %c0_158, %c0_159] : memref<3x5x16x16xf32, #tpu.memory_space<vmem>>, vector<1x1x16x16xf32>
    %138 = vector.shape_cast %137 : vector<1x1x16x16xf32> to vector<16x16xf32>
    %cst_160 = arith.constant dense<0.000000e+00> : vector<32x16xf32>
    %139 = tpu.matmul %122, %138, %cst_160 {dimension_numbers = #tpu.dot_dimension_numbers<[1], [0], [0], [1], [0, 0, 1, 1], [], []>} : vector<32x16xf32>, vector<16x16xf32>, vector<32x16xf32> -> vector<32x16xf32>
    %140 = arith.addf %136, %139 : vector<32x16xf32>
    %c0_161 = arith.constant 0 : index
    %c0_162 = arith.constant 0 : index
    %c0_163 = arith.constant 0 : index
    %141 = vector.load %arg2[%c0_161, %c0_162, %c0_163] : memref<4x32x32xf32, #tpu.memory_space<vmem>>, vector<1x32x32xf32>
    %142 = vector.shape_cast %141 : vector<1x32x32xf32> to vector<32x32xf32>
    %cst_164 = arith.constant dense<0.000000e+00> : vector<32x16xf32>
    %143 = tpu.matmul %142, %140, %cst_164 {dimension_numbers = #tpu.dot_dimension_numbers<[1], [0], [0], [1], [0, 0, 1, 1], [], []>} : vector<32x32xf32>, vector<32x16xf32>, vector<32x16xf32> -> vector<32x16xf32>
    %144 = arith.addf %133, %143 : vector<32x16xf32>
    %c2_165 = arith.constant 2 : index
    %c2_166 = arith.constant 2 : index
    %c0_167 = arith.constant 0 : index
    %c0_168 = arith.constant 0 : index
    %145 = vector.load %arg3[%c2_165, %c2_166, %c0_167, %c0_168] : memref<3x5x2x16xf32, #tpu.memory_space<vmem>>, vector<1x1x2x16xf32>
    %146 = vector.shape_cast %145 : vector<1x1x2x16xf32> to vector<2x16xf32>
    %cst_169 = arith.constant dense<0.000000e+00> : vector<32x16xf32>
    %147 = tpu.matmul %0, %146, %cst_169 {dimension_numbers = #tpu.dot_dimension_numbers<[1], [0], [0], [1], [0, 0, 1, 1], [], []>} : vector<32x2xf32>, vector<2x16xf32>, vector<32x16xf32> -> vector<32x16xf32>
    %c2_170 = arith.constant 2 : index
    %c2_171 = arith.constant 2 : index
    %c0_172 = arith.constant 0 : index
    %c0_173 = arith.constant 0 : index
    %148 = vector.load %arg4[%c2_170, %c2_171, %c0_172, %c0_173] : memref<3x5x16x16xf32, #tpu.memory_space<vmem>>, vector<1x1x16x16xf32>
    %149 = vector.shape_cast %148 : vector<1x1x16x16xf32> to vector<16x16xf32>
    %cst_174 = arith.constant dense<0.000000e+00> : vector<32x16xf32>
    %150 = tpu.matmul %122, %149, %cst_174 {dimension_numbers = #tpu.dot_dimension_numbers<[1], [0], [0], [1], [0, 0, 1, 1], [], []>} : vector<32x16xf32>, vector<16x16xf32>, vector<32x16xf32> -> vector<32x16xf32>
    %151 = arith.addf %147, %150 : vector<32x16xf32>
    %c1_175 = arith.constant 1 : index
    %c0_176 = arith.constant 0 : index
    %c0_177 = arith.constant 0 : index
    %152 = vector.load %arg2[%c1_175, %c0_176, %c0_177] : memref<4x32x32xf32, #tpu.memory_space<vmem>>, vector<1x32x32xf32>
    %153 = vector.shape_cast %152 : vector<1x32x32xf32> to vector<32x32xf32>
    %cst_178 = arith.constant dense<0.000000e+00> : vector<32x16xf32>
    %154 = tpu.matmul %153, %151, %cst_178 {dimension_numbers = #tpu.dot_dimension_numbers<[1], [0], [0], [1], [0, 0, 1, 1], [], []>} : vector<32x32xf32>, vector<32x16xf32>, vector<32x16xf32> -> vector<32x16xf32>
    %155 = arith.addf %144, %154 : vector<32x16xf32>
    %c2_179 = arith.constant 2 : index
    %c3_180 = arith.constant 3 : index
    %c0_181 = arith.constant 0 : index
    %c0_182 = arith.constant 0 : index
    %156 = vector.load %arg3[%c2_179, %c3_180, %c0_181, %c0_182] : memref<3x5x2x16xf32, #tpu.memory_space<vmem>>, vector<1x1x2x16xf32>
    %157 = vector.shape_cast %156 : vector<1x1x2x16xf32> to vector<2x16xf32>
    %cst_183 = arith.constant dense<0.000000e+00> : vector<32x16xf32>
    %158 = tpu.matmul %0, %157, %cst_183 {dimension_numbers = #tpu.dot_dimension_numbers<[1], [0], [0], [1], [0, 0, 1, 1], [], []>} : vector<32x2xf32>, vector<2x16xf32>, vector<32x16xf32> -> vector<32x16xf32>
    %c2_184 = arith.constant 2 : index
    %c3_185 = arith.constant 3 : index
    %c0_186 = arith.constant 0 : index
    %c0_187 = arith.constant 0 : index
    %159 = vector.load %arg4[%c2_184, %c3_185, %c0_186, %c0_187] : memref<3x5x16x16xf32, #tpu.memory_space<vmem>>, vector<1x1x16x16xf32>
    %160 = vector.shape_cast %159 : vector<1x1x16x16xf32> to vector<16x16xf32>
    %cst_188 = arith.constant dense<0.000000e+00> : vector<32x16xf32>
    %161 = tpu.matmul %122, %160, %cst_188 {dimension_numbers = #tpu.dot_dimension_numbers<[1], [0], [0], [1], [0, 0, 1, 1], [], []>} : vector<32x16xf32>, vector<16x16xf32>, vector<32x16xf32> -> vector<32x16xf32>
    %162 = arith.addf %158, %161 : vector<32x16xf32>
    %c2_189 = arith.constant 2 : index
    %c0_190 = arith.constant 0 : index
    %c0_191 = arith.constant 0 : index
    %163 = vector.load %arg2[%c2_189, %c0_190, %c0_191] : memref<4x32x32xf32, #tpu.memory_space<vmem>>, vector<1x32x32xf32>
    %164 = vector.shape_cast %163 : vector<1x32x32xf32> to vector<32x32xf32>
    %cst_192 = arith.constant dense<0.000000e+00> : vector<32x16xf32>
    %165 = tpu.matmul %164, %162, %cst_192 {dimension_numbers = #tpu.dot_dimension_numbers<[1], [0], [0], [1], [0, 0, 1, 1], [], []>} : vector<32x32xf32>, vector<32x16xf32>, vector<32x16xf32> -> vector<32x16xf32>
    %166 = arith.addf %155, %165 : vector<32x16xf32>
    %c2_193 = arith.constant 2 : index
    %c4_194 = arith.constant 4 : index
    %c0_195 = arith.constant 0 : index
    %c0_196 = arith.constant 0 : index
    %167 = vector.load %arg3[%c2_193, %c4_194, %c0_195, %c0_196] : memref<3x5x2x16xf32, #tpu.memory_space<vmem>>, vector<1x1x2x16xf32>
    %168 = vector.shape_cast %167 : vector<1x1x2x16xf32> to vector<2x16xf32>
    %cst_197 = arith.constant dense<0.000000e+00> : vector<32x16xf32>
    %169 = tpu.matmul %0, %168, %cst_197 {dimension_numbers = #tpu.dot_dimension_numbers<[1], [0], [0], [1], [0, 0, 1, 1], [], []>} : vector<32x2xf32>, vector<2x16xf32>, vector<32x16xf32> -> vector<32x16xf32>
    %c2_198 = arith.constant 2 : index
    %c4_199 = arith.constant 4 : index
    %c0_200 = arith.constant 0 : index
    %c0_201 = arith.constant 0 : index
    %170 = vector.load %arg4[%c2_198, %c4_199, %c0_200, %c0_201] : memref<3x5x16x16xf32, #tpu.memory_space<vmem>>, vector<1x1x16x16xf32>
    %171 = vector.shape_cast %170 : vector<1x1x16x16xf32> to vector<16x16xf32>
    %cst_202 = arith.constant dense<0.000000e+00> : vector<32x16xf32>
    %172 = tpu.matmul %122, %171, %cst_202 {dimension_numbers = #tpu.dot_dimension_numbers<[1], [0], [0], [1], [0, 0, 1, 1], [], []>} : vector<32x16xf32>, vector<16x16xf32>, vector<32x16xf32> -> vector<32x16xf32>
    %173 = arith.addf %169, %172 : vector<32x16xf32>
    %c3_203 = arith.constant 3 : index
    %c0_204 = arith.constant 0 : index
    %c0_205 = arith.constant 0 : index
    %174 = vector.load %arg2[%c3_203, %c0_204, %c0_205] : memref<4x32x32xf32, #tpu.memory_space<vmem>>, vector<1x32x32xf32>
    %175 = vector.shape_cast %174 : vector<1x32x32xf32> to vector<32x32xf32>
    %cst_206 = arith.constant dense<0.000000e+00> : vector<32x16xf32>
    %176 = tpu.matmul %175, %173, %cst_206 {dimension_numbers = #tpu.dot_dimension_numbers<[1], [0], [0], [1], [0, 0, 1, 1], [], []>} : vector<32x32xf32>, vector<32x16xf32>, vector<32x16xf32> -> vector<32x16xf32>
    %177 = arith.addf %166, %176 : vector<32x16xf32>
    %178 = math.tanh %177 : vector<32x16xf32>
    %179 = arith.mulf %121, %1 : vector<32x16xf32>
    %cst_207 = arith.constant 1.000000e+00 : f32
    %180 = vector.broadcast %cst_207 : f32 to vector<32x16xf32>
    %181 = arith.subf %180, %121 : vector<32x16xf32>
    %182 = arith.mulf %181, %178 : vector<32x16xf32>
    %183 = arith.addf %179, %182 : vector<32x16xf32>
    %c0_208 = arith.constant 0 : index
    %c0_209 = arith.constant 0 : index
    %184 = vector.load %arg6[%c0_208, %c0_209] : memref<32x16xf32, #tpu.memory_space<vmem>>, vector<32x16xf32>
    tpu.vector_store %arg6[%c0_208, %c0_209], %183 {strides = array<i32>} : memref<32x16xf32, #tpu.memory_space<vmem>>, vector<32x16xf32>,
    return
  }
}

</mosaic_0001>

<llo_original>
// kernel: tpu_custom_call.1
$region0: #{tpu_custom_call.1}
  #allocation0 [shape = 'u32[]', space=smem, size = 0x4, offset = 0x4, fixed_abs, tag = 'smem constant byte address 0x4 - core index']
  #allocation1 [shape = 'u32[72,128]{1,0:T(1,128)}', space=vmem, size = 0x9000, scoped, tag = 'internal scratch']
  %s0 = inlined_call_operand.vmem [shape: f32[32,2], index: 0, kind: input, shape index: {}]
  %s1 = inlined_call_operand.vmem [shape: f32[32,16], index: 1, kind: input, shape index: {}]
  %s2 = inlined_call_operand.hbm [shape: f32[4,32,32], index: 2, kind: input, shape index: {}]
  %s3 = inlined_call_operand.vmem [shape: f32[3,5,2,16], index: 3, kind: input, shape index: {}]
  %s4 = inlined_call_operand.hbm [shape: f32[3,5,16,16], index: 4, kind: input, shape index: {}]
  %s5 = inlined_call_operand.vmem [shape: f32[3,1,16], index: 5, kind: input, shape index: {}]
  %s6 = inlined_call_operand.vmem [shape: f32[32,16], index: 6, kind: output, shape index: {}]
  %s7 = sld [smem:[#allocation0]]
  $region42: #{tpu_custom_call.1} parent=0
    _
  %s9 = ssub.s32 1, %s7
  %s10 = scalar_select 0, %s9, %s7
  $region1: #{tpu_custom_call.1} parent=0
    #allocation2 [shape = 'u8[65536]{0}', space=vmem, size = 0x10000, scoped, tag = 'input window, operand 2, single buffered']
    #allocation3 [shape = 's32[1]{0}', space=sflag, size = 0x4, scoped, tag = 'scoped memory for tpu_custom_call.1']
    #allocation4 [shape = 'u8[122880]{0}', space=vmem, size = 0x1e000, scoped, tag = 'input window, operand 4, single buffered']
    #allocation5 [shape = 's32[1]{0}', space=sflag, size = 0x4, scoped, tag = 'scoped memory for tpu_custom_call.1']
    %11 = vsyncpa [#allocation3], 0
    %12 = vsyncpa [#allocation5], 0
    // Predicated region
    $region2: #{tpu_custom_call.1} parent=1 // pred_check
      _
    $region3: #{tpu_custom_call.1} parent=1 // pred_check_branch
      %14 = sbr.rel (0) target = $region5
    $region4: #{tpu_custom_call.1} parent=1 // pred_region
      _
    $region5: #{tpu_custom_call.1} parent=1 // pred_fallthru
      _
    // Predicated region
    $region6: #{tpu_custom_call.1} parent=1 // pred_check
      _
    $region7: #{tpu_custom_call.1} parent=1 // pred_check_branch
      %16 = sbr.rel (0) target = $region9
    $region8: #{tpu_custom_call.1} parent=1 // pred_region
      _
    $region9: #{tpu_custom_call.1} parent=1 // pred_fallthru
      _
    // Predicated region
    $region10: #{tpu_custom_call.1} parent=1 // pred_check
      _
    $region11: #{tpu_custom_call.1} parent=1 // pred_check_branch
      %18 = sbr.rel (0) target = $region13
    $region12: #{tpu_custom_call.1} parent=1 // pred_region
      %20 = vsyncadd [#allocation3], 0
      %s21 = sshll.u32 %s2, 4
      %s22 = int_to_ptr.hbm [resolvable:$true] %s21
      %s23 = sshll.u32 [#allocation2], 4
      %s24 = int_to_ptr.vmem [resolvable:$true] %s23
      %29 = dma.hbm_to_vmem [thread:$0]  %s22, 2048, %s24, [#allocation3], 128, 128, 8
    $region13: #{tpu_custom_call.1} parent=1 // pred_fallthru
      _
    // Predicated region
    $region14: #{tpu_custom_call.1} parent=1 // pred_check
      _
    $region15: #{tpu_custom_call.1} parent=1 // pred_check_branch
      %31 = sbr.rel (0) target = $region17
    $region16: #{tpu_custom_call.1} parent=1 // pred_region
      _
    $region17: #{tpu_custom_call.1} parent=1 // pred_fallthru
      _
    // Predicated region
    $region18: #{tpu_custom_call.1} parent=1 // pred_check
      _
    $region19: #{tpu_custom_call.1} parent=1 // pred_check_branch
      %33 = sbr.rel (0) target = $region21
    $region20: #{tpu_custom_call.1} parent=1 // pred_region
      %35 = vsyncadd [#allocation5], 0
      %s36 = sshll.u32 %s4, 4
      %s37 = int_to_ptr.hbm [resolvable:$true] %s36
      %s38 = sshll.u32 [#allocation4], 4
      %s39 = int_to_ptr.vmem [resolvable:$true] %s38
      %44 = dma.hbm_to_vmem [thread:$0]  %s37, 3840, %s39, [#allocation5], 128, 128, 8
    $region21: #{tpu_custom_call.1} parent=1 // pred_fallthru
      _
    // Predicated region
    $region22: #{tpu_custom_call.1} parent=1 // pred_check
      _
    $region23: #{tpu_custom_call.1} parent=1 // pred_check_branch
      %46 = sbr.rel (0) target = $region25
    $region24: #{tpu_custom_call.1} parent=1 // pred_region
      _
    $region25: #{tpu_custom_call.1} parent=1 // pred_fallthru
      _
    // Predicated region
    $region26: #{tpu_custom_call.1} parent=1 // pred_check
      _
    $region27: #{tpu_custom_call.1} parent=1 // pred_check_branch
      %48 = sbr.rel (0) target = $region29
    $region28: #{tpu_custom_call.1} parent=1 // pred_region
      %50 = dma.done [#allocation3], 2048
    $region29: #{tpu_custom_call.1} parent=1 // pred_fallthru
      _
    // Predicated region
    $region30: #{tpu_custom_call.1} parent=1 // pred_check
      _
    $region31: #{tpu_custom_call.1} parent=1 // pred_check_branch
      %52 = sbr.rel (0) target = $region33
    $region32: #{tpu_custom_call.1} parent=1 // pred_region
      %54 = dma.done [#allocation5], 3840
    $region33: #{tpu_custom_call.1} parent=1 // pred_fallthru
      _
    %v55 = vld [vmem:[%s0] sm:$0xff]
    %v56 = vld [vmem:[%s0 + $0x8] sm:$0xff]
    %v57 = vld [vmem:[%s0 + $0x10] sm:$0xff]
    %v58 = vld [vmem:[%s0 + $0x18] sm:$0xff]
    %v59 = vld [vmem:[%s1] sm:$0xff]
    %v60 = vld [vmem:[%s1 + $0x8] sm:$0xff]
    %v61 = vld [vmem:[%s1 + $0x10] sm:$0xff]
    %v62 = vld [vmem:[%s1 + $0x18] sm:$0xff]
    %v63 = vld [vmem:[%s3] sm:$0x3]
    %v64 = vld [vmem:[#allocation4] sm:$0xff]
    %v65 = vld [vmem:[#allocation4 + $0x8] sm:$0xff]
    %vm66 = vcmask 130048
    %v68 = vsel %vm66, %v59, 0
    %v71 = vsel %vm66, %v60, 0
    %v74 = vsel %vm66, %v61, 0
    %v77 = vsel %vm66, %v62, 0
    %79 = vmatpush.msra.mxu0 0.0
    %80 = vmatpush.msra.mxu0 0.0
    %81 = vmatpush.msra.mxu0 0.0
    %82 = vmatpush.msra.mxu0 0.0
    %83 = vmatpush.msra.mxu0 0.0
    %84 = vmatpush.msra.mxu0 0.0
    %85 = vmatpush.msra.mxu0 0.0
    %86 = vmatpush.msra.mxu0 0.0
    %87 = vmatpush.msra.mxu0 0.0
    %88 = vmatpush.msra.mxu0 0.0
    %89 = vmatpush.msra.mxu0 0.0
    %90 = vmatpush.msra.mxu0 0.0
    %91 = vmatpush.msra.mxu0 0.0
    %92 = vmatpush.msra.mxu0 0.0
    %93 = vmatpush.msra.mxu0 %v65
    %94 = vmatpush.msra.mxu0 %v64
    %95 = vmatmul.f32.gmra.mxu0 %v68
    %v96 = vpop.f32.mrf.mxu0
    %v97 = vadd.f32 0.0, %v96
    %98 = vmatmul.f32.gmra.mxu0 %v71
    %v99 = vpop.f32.mrf.mxu0
    %v100 = vadd.f32 0.0, %v99
    %101 = vmatmul.f32.gmra.mxu0 %v74
    %v102 = vpop.f32.mrf.mxu0
    %v103 = vadd.f32 0.0, %v102
    %104 = vmatmul.f32.gmra.mxu0 %v77
    %v105 = vpop.f32.mrf.mxu0
    %v106 = vadd.f32 0.0, %v105
    %107 = vdwg.mxu0
    %vm108 = vcmask 15360
    %v110 = vsel %vm108, %v55, 0
    %v113 = vsel %vm108, %v56, 0
    %v116 = vsel %vm108, %v57, 0
    %v119 = vsel %vm108, %v58, 0
    %vm121 = vcmask 1041408
    %v123 = vsel %vm121, %v63, 0
    %125 = vmatpush.msra.mxu0 0.0
    %126 = vmatpush.msra.mxu0 0.0
    %127 = vmatpush.msra.mxu0 0.0
    %128 = vmatpush.msra.mxu0 0.0
    %129 = vmatpush.msra.mxu0 0.0
    %130 = vmatpush.msra.mxu0 0.0
    %131 = vmatpush.msra.mxu0 0.0
    %132 = vmatpush.msra.mxu0 0.0
    %133 = vmatpush.msra.mxu0 0.0
    %134 = vmatpush.msra.mxu0 0.0
    %135 = vmatpush.msra.mxu0 0.0
    %136 = vmatpush.msra.mxu0 0.0
    %137 = vmatpush.msra.mxu0 0.0
    %138 = vmatpush.msra.mxu0 0.0
    %139 = vmatpush.msra.mxu0 0.0
    %140 = vmatpush.msra.mxu0 %v123
    %141 = vmatmul.f32.gmra.mxu0 %v110
    %v142 = vpop.f32.mrf.mxu0
    %v143 = vadd.f32 %v97, %v142
    %144 = vmatmul.f32.gmra.mxu0 %v113
    %v145 = vpop.f32.mrf.mxu0
    %v146 = vadd.f32 %v100, %v145
    %147 = vmatmul.f32.gmra.mxu0 %v116
    %v148 = vpop.f32.mrf.mxu0
    %v149 = vadd.f32 %v103, %v148
    %150 = vmatmul.f32.gmra.mxu0 %v119
    %v151 = vpop.f32.mrf.mxu0
    %v152 = vadd.f32 %v106, %v151
    %153 = vdwg.mxu0
    %v154 = vld [vmem:[%s5] sm:$0x1]
    %v156 = vperm.slane %v154, 0
    %v158 = vadd.f32 %v143, %v156
    %v159 = vadd.f32 %v146, %v156
    %v160 = vadd.f32 %v149, %v156
    %v161 = vadd.f32 %v152, %v156
    %s162 = scalar_lea.vmem %s3, 2
    %v163 = vld [vmem:[%s162] sm:$0x3]
    %s164 = scalar_lea.vmem [#allocation4], 16
    %v165 = vld [vmem:[%s164] sm:$0xff]
    %v166 = vld [vmem:[%s164 + $0x8] sm:$0xff]
    %167 = vmatpush.msra.mxu0 0.0
    %168 = vmatpush.msra.mxu0 0.0
    %169 = vmatpush.msra.mxu0 0.0
    %170 = vmatpush.msra.mxu0 0.0
    %171 = vmatpush.msra.mxu0 0.0
    %172 = vmatpush.msra.mxu0 0.0
    %173 = vmatpush.msra.mxu0 0.0
    %174 = vmatpush.msra.mxu0 0.0
    %175 = vmatpush.msra.mxu0 0.0
    %176 = vmatpush.msra.mxu0 0.0
    %177 = vmatpush.msra.mxu0 0.0
    %178 = vmatpush.msra.mxu0 0.0
    %179 = vmatpush.msra.mxu0 0.0
    %180 = vmatpush.msra.mxu0 0.0
    %181 = vmatpush.msra.mxu0 %v166
    %182 = vmatpush.msra.mxu0 %v165
    %183 = vmatmul.f32.gmra.mxu0 %v68
    %v184 = vpop.f32.mrf.mxu0
    %v185 = vadd.f32 0.0, %v184
    %186 = vmatmul.f32.gmra.mxu0 %v71
    %v187 = vpop.f32.mrf.mxu0
    %v188 = vadd.f32 0.0, %v187
    %189 = vmatmul.f32.gmra.mxu0 %v74
    %v190 = vpop.f32.mrf.mxu0
    %v191 = vadd.f32 0.0, %v190
    %192 = vmatmul.f32.gmra.mxu0 %v77
    %v193 = vpop.f32.mrf.mxu0
    %v194 = vadd.f32 0.0, %v193
    %195 = vdwg.mxu0
    %v197 = vsel %vm121, %v163, 0
    %199 = vmatpush.msra.mxu0 0.0
    %200 = vmatpush.msra.mxu0 0.0
    %201 = vmatpush.msra.mxu0 0.0
    %202 = vmatpush.msra.mxu0 0.0
    %203 = vmatpush.msra.mxu0 0.0
    %204 = vmatpush.msra.mxu0 0.0
    %205 = vmatpush.msra.mxu0 0.0
    %206 = vmatpush.msra.mxu0 0.0
    %207 = vmatpush.msra.mxu0 0.0
    %208 = vmatpush.msra.mxu0 0.0
    %209 = vmatpush.msra.mxu0 0.0
    %210 = vmatpush.msra.mxu0 0.0
    %211 = vmatpush.msra.mxu0 0.0
    %212 = vmatpush.msra.mxu0 0.0
    %213 = vmatpush.msra.mxu0 0.0
    %214 = vmatpush.msra.mxu0 %v197
    %215 = vmatmul.f32.gmra.mxu0 %v110
    %v216 = vpop.f32.mrf.mxu0
    %v217 = vadd.f32 %v185, %v216
    %218 = vmatmul.f32.gmra.mxu0 %v113
    %v219 = vpop.f32.mrf.mxu0
    %v220 = vadd.f32 %v188, %v219
    %221 = vmatmul.f32.gmra.mxu0 %v116
    %v222 = vpop.f32.mrf.mxu0
    %v223 = vadd.f32 %v191, %v222
    %224 = vmatmul.f32.gmra.mxu0 %v119
    %v225 = vpop.f32.mrf.mxu0
    %v226 = vadd.f32 %v194, %v225
    %227 = vdwg.mxu0
    %v228 = vld [vmem:[#allocation2] sm:$0xff]
    %v229 = vld [vmem:[#allocation2 + $0x8] sm:$0xff]
    %v230 = vld [vmem:[#allocation2 + $0x10] sm:$0xff]
    %v231 = vld [vmem:[#allocation2 + $0x18] sm:$0xff]
    %vm232 = vcmask 261120
    %v234 = vsel %vm232, %v228, 0
    %v237 = vsel %vm232, %v229, 0
    %v240 = vsel %vm232, %v230, 0
    %v243 = vsel %vm232, %v231, 0
    %245 = vmatpush.msra.mxu0 0.0
    %246 = vmatpush.msra.mxu0 0.0
    %247 = vmatpush.msra.mxu0 0.0
    %248 = vmatpush.msra.mxu0 0.0
    %249 = vmatpush.msra.mxu0 0.0
    %250 = vmatpush.msra.mxu0 0.0
    %251 = vmatpush.msra.mxu0 0.0
    %252 = vmatpush.msra.mxu0 0.0
    %253 = vmatpush.msra.mxu0 0.0
    %254 = vmatpush.msra.mxu0 0.0
    %255 = vmatpush.msra.mxu0 0.0
    %256 = vmatpush.msra.mxu0 0.0
    %257 = vmatpush.msra.mxu0 %v226
    %258 = vmatpush.msra.mxu0 %v223
    %259 = vmatpush.msra.mxu0 %v220
    %260 = vmatpush.msra.mxu0 %v217
    %261 = vmatmul.f32.gmra.mxu0 %v234
    %v262 = vpop.f32.mrf.mxu0
    %v263 = vadd.f32 0.0, %v262
    %264 = vmatmul.f32.gmra.mxu0 %v237
    %v265 = vpop.f32.mrf.mxu0
    %v266 = vadd.f32 0.0, %v265
    %267 = vmatmul.f32.gmra.mxu0 %v240
    %v268 = vpop.f32.mrf.mxu0
    %v269 = vadd.f32 0.0, %v268
    %270 = vmatmul.f32.gmra.mxu0 %v243
    %v271 = vpop.f32.mrf.mxu0
    %v272 = vadd.f32 0.0, %v271
    %273 = vdwg.mxu0
    %v274 = vadd.f32 %v158, %v263
    %v275 = vadd.f32 %v159, %v266
    %v276 = vadd.f32 %v160, %v269
    %v277 = vadd.f32 %v161, %v272
    %s278 = scalar_lea.vmem %s3, 4
    %v279 = vld [vmem:[%s278] sm:$0x3]
    %s280 = scalar_lea.vmem [#allocation4], 32
    %v281 = vld [vmem:[%s280] sm:$0xff]
    %v282 = vld [vmem:[%s280 + $0x8] sm:$0xff]
    %283 = vmatpush.msra.mxu0 0.0
    %284 = vmatpush.msra.mxu0 0.0
    %285 = vmatpush.msra.mxu0 0.0
    %286 = vmatpush.msra.mxu0 0.0
    %287 = vmatpush.msra.mxu0 0.0
    %288 = vmatpush.msra.mxu0 0.0
    %289 = vmatpush.msra.mxu0 0.0
    %290 = vmatpush.msra.mxu0 0.0
    %291 = vmatpush.msra.mxu0 0.0
    %292 = vmatpush.msra.mxu0 0.0
    %293 = vmatpush.msra.mxu0 0.0
    %294 = vmatpush.msra.mxu0 0.0
    %295 = vmatpush.msra.mxu0 0.0
    %296 = vmatpush.msra.mxu0 0.0
    %297 = vmatpush.msra.mxu0 %v282
    %298 = vmatpush.msra.mxu0 %v281
    %299 = vmatmul.f32.gmra.mxu0 %v68
    %v300 = vpop.f32.mrf.mxu0
    %v301 = vadd.f32 0.0, %v300
    %302 = vmatmul.f32.gmra.mxu0 %v71
    %v303 = vpop.f32.mrf.mxu0
    %v304 = vadd.f32 0.0, %v303
    %305 = vmatmul.f32.gmra.mxu0 %v74
    %v306 = vpop.f32.mrf.mxu0
    %v307 = vadd.f32 0.0, %v306
    %308 = vmatmul.f32.gmra.mxu0 %v77
    %v309 = vpop.f32.mrf.mxu0
    %v310 = vadd.f32 0.0, %v309
    %311 = vdwg.mxu0
    %v313 = vsel %vm121, %v279, 0
    %315 = vmatpush.msra.mxu0 0.0
    %316 = vmatpush.msra.mxu0 0.0
    %317 = vmatpush.msra.mxu0 0.0
    %318 = vmatpush.msra.mxu0 0.0
    %319 = vmatpush.msra.mxu0 0.0
    %320 = vmatpush.msra.mxu0 0.0
    %321 = vmatpush.msra.mxu0 0.0
    %322 = vmatpush.msra.mxu0 0.0
    %323 = vmatpush.msra.mxu0 0.0
    %324 = vmatpush.msra.mxu0 0.0
    %325 = vmatpush.msra.mxu0 0.0
    %326 = vmatpush.msra.mxu0 0.0
    %327 = vmatpush.msra.mxu0 0.0
    %328 = vmatpush.msra.mxu0 0.0
    %329 = vmatpush.msra.mxu0 0.0
    %330 = vmatpush.msra.mxu0 %v313
    %331 = vmatmul.f32.gmra.mxu0 %v110
    %v332 = vpop.f32.mrf.mxu0
    %v333 = vadd.f32 %v301, %v332
    %334 = vmatmul.f32.gmra.mxu0 %v113
    %v335 = vpop.f32.mrf.mxu0
    %v336 = vadd.f32 %v304, %v335
    %337 = vmatmul.f32.gmra.mxu0 %v116
    %v338 = vpop.f32.mrf.mxu0
    %v339 = vadd.f32 %v307, %v338
    %340 = vmatmul.f32.gmra.mxu0 %v119
    %v341 = vpop.f32.mrf.mxu0
    %v342 = vadd.f32 %v310, %v341
    %343 = vdwg.mxu0
    %s344 = scalar_lea.vmem [#allocation2], 32
    %v345 = vld [vmem:[%s344] sm:$0xff]
    %v346 = vld [vmem:[%s344 + $0x8] sm:$0xff]
    %v347 = vld [vmem:[%s344 + $0x10] sm:$0xff]
    %v348 = vld [vmem:[%s344 + $0x18] sm:$0xff]
    %v350 = vsel %vm232, %v345, 0
    %v353 = vsel %vm232, %v346, 0
    %v356 = vsel %vm232, %v347, 0
    %v359 = vsel %vm232, %v348, 0
    %361 = vmatpush.msra.mxu0 0.0
    %362 = vmatpush.msra.mxu0 0.0
    %363 = vmatpush.msra.mxu0 0.0
    %364 = vmatpush.msra.mxu0 0.0
    %365 = vmatpush.msra.mxu0 0.0
    %366 = vmatpush.msra.mxu0 0.0
    %367 = vmatpush.msra.mxu0 0.0
    %368 = vmatpush.msra.mxu0 0.0
    %369 = vmatpush.msra.mxu0 0.0
    %370 = vmatpush.msra.mxu0 0.0
    %371 = vmatpush.msra.mxu0 0.0
    %372 = vmatpush.msra.mxu0 0.0
    %373 = vmatpush.msra.mxu0 %v342
    %374 = vmatpush.msra.mxu0 %v339
    %375 = vmatpush.msra.mxu0 %v336
    %376 = vmatpush.msra.mxu0 %v333
    %377 = vmatmul.f32.gmra.mxu0 %v350
    %v378 = vpop.f32.mrf.mxu0
    %v379 = vadd.f32 0.0, %v378
    %380 = vmatmul.f32.gmra.mxu0 %v353
    %v381 = vpop.f32.mrf.mxu0
    %v382 = vadd.f32 0.0, %v381
    %383 = vmatmul.f32.gmra.mxu0 %v356
    %v384 = vpop.f32.mrf.mxu0
    %v385 = vadd.f32 0.0, %v384
    %386 = vmatmul.f32.gmra.mxu0 %v359
    %v387 = vpop.f32.mrf.mxu0
    %v388 = vadd.f32 0.0, %v387
    %389 = vdwg.mxu0
    %v390 = vadd.f32 %v274, %v379
    %v391 = vadd.f32 %v275, %v382
    %v392 = vadd.f32 %v276, %v385
    %v393 = vadd.f32 %v277, %v388
    %s394 = scalar_lea.vmem %s3, 6
    %v395 = vld [vmem:[%s394] sm:$0x3]
    %s396 = scalar_lea.vmem [#allocation4], 48
    %v397 = vld [vmem:[%s396] sm:$0xff]
    %v398 = vld [vmem:[%s396 + $0x8] sm:$0xff]
    %399 = vmatpush.msra.mxu0 0.0
    %400 = vmatpush.msra.mxu0 0.0
    %401 = vmatpush.msra.mxu0 0.0
    %402 = vmatpush.msra.mxu0 0.0
    %403 = vmatpush.msra.mxu0 0.0
    %404 = vmatpush.msra.mxu0 0.0
    %405 = vmatpush.msra.mxu0 0.0
    %406 = vmatpush.msra.mxu0 0.0
    %407 = vmatpush.msra.mxu0 0.0
    %408 = vmatpush.msra.mxu0 0.0
    %409 = vmatpush.msra.mxu0 0.0
    %410 = vmatpush.msra.mxu0 0.0
    %411 = vmatpush.msra.mxu0 0.0
    %412 = vmatpush.msra.mxu0 0.0
    %413 = vmatpush.msra.mxu0 %v398
    %414 = vmatpush.msra.mxu0 %v397
    %415 = vmatmul.f32.gmra.mxu0 %v68
    %v416 = vpop.f32.mrf.mxu0
    %v417 = vadd.f32 0.0, %v416
    %418 = vmatmul.f32.gmra.mxu0 %v71
    %v419 = vpop.f32.mrf.mxu0
    %v420 = vadd.f32 0.0, %v419
    %421 = vmatmul.f32.gmra.mxu0 %v74
    %v422 = vpop.f32.mrf.mxu0
    %v423 = vadd.f32 0.0, %v422
    %424 = vmatmul.f32.gmra.mxu0 %v77
    %v425 = vpop.f32.mrf.mxu0
    %v426 = vadd.f32 0.0, %v425
    %427 = vdwg.mxu0
    %v429 = vsel %vm121, %v395, 0
    %431 = vmatpush.msra.mxu0 0.0
    %432 = vmatpush.msra.mxu0 0.0
    %433 = vmatpush.msra.mxu0 0.0
    %434 = vmatpush.msra.mxu0 0.0
    %435 = vmatpush.msra.mxu0 0.0
    %436 = vmatpush.msra.mxu0 0.0
    %437 = vmatpush.msra.mxu0 0.0
    %438 = vmatpush.msra.mxu0 0.0
    %439 = vmatpush.msra.mxu0 0.0
    %440 = vmatpush.msra.mxu0 0.0
    %441 = vmatpush.msra.mxu0 0.0
    %442 = vmatpush.msra.mxu0 0.0
    %443 = vmatpush.msra.mxu0 0.0
    %444 = vmatpush.msra.mxu0 0.0
    %445 = vmatpush.msra.mxu0 0.0
    %446 = vmatpush.msra.mxu0 %v429
    %447 = vmatmul.f32.gmra.mxu0 %v110
    %v448 = vpop.f32.mrf.mxu0
    %v449 = vadd.f32 %v417, %v448
    %450 = vmatmul.f32.gmra.mxu0 %v113
    %v451 = vpop.f32.mrf.mxu0
    %v452 = vadd.f32 %v420, %v451
    %453 = vmatmul.f32.gmra.mxu0 %v116
    %v454 = vpop.f32.mrf.mxu0
    %v455 = vadd.f32 %v423, %v454
    %456 = vmatmul.f32.gmra.mxu0 %v119
    %v457 = vpop.f32.mrf.mxu0
    %v458 = vadd.f32 %v426, %v457
    %459 = vdwg.mxu0
    %s460 = scalar_lea.vmem [#allocation2], 64
    %v461 = vld [vmem:[%s460] sm:$0xff]
    %v462 = vld [vmem:[%s460 + $0x8] sm:$0xff]
    %v463 = vld [vmem:[%s460 + $0x10] sm:$0xff]
    %v464 = vld [vmem:[%s460 + $0x18] sm:$0xff]
    %v466 = vsel %vm232, %v461, 0
    %v469 = vsel %vm232, %v462, 0
    %v472 = vsel %vm232, %v463, 0
    %v475 = vsel %vm232, %v464, 0
    %477 = vmatpush.msra.mxu0 0.0
    %478 = vmatpush.msra.mxu0 0.0
    %479 = vmatpush.msra.mxu0 0.0
    %480 = vmatpush.msra.mxu0 0.0
    %481 = vmatpush.msra.mxu0 0.0
    %482 = vmatpush.msra.mxu0 0.0
    %483 = vmatpush.msra.mxu0 0.0
    %484 = vmatpush.msra.mxu0 0.0
    %485 = vmatpush.msra.mxu0 0.0
    %486 = vmatpush.msra.mxu0 0.0
    %487 = vmatpush.msra.mxu0 0.0
    %488 = vmatpush.msra.mxu0 0.0
    %489 = vmatpush.msra.mxu0 %v458
    %490 = vmatpush.msra.mxu0 %v455
    %491 = vmatpush.msra.mxu0 %v452
    %492 = vmatpush.msra.mxu0 %v449
    %493 = vmatmul.f32.gmra.mxu0 %v466
    %v494 = vpop.f32.mrf.mxu0
    %v495 = vadd.f32 0.0, %v494
    %496 = vmatmul.f32.gmra.mxu0 %v469
    %v497 = vpop.f32.mrf.mxu0
    %v498 = vadd.f32 0.0, %v497
    %499 = vmatmul.f32.gmra.mxu0 %v472
    %v500 = vpop.f32.mrf.mxu0
    %v501 = vadd.f32 0.0, %v500
    %502 = vmatmul.f32.gmra.mxu0 %v475
    %v503 = vpop.f32.mrf.mxu0
    %v504 = vadd.f32 0.0, %v503
    %505 = vdwg.mxu0
    %v506 = vadd.f32 %v390, %v495
    %v507 = vadd.f32 %v391, %v498
    %v508 = vadd.f32 %v392, %v501
    %v509 = vadd.f32 %v393, %v504
    %s510 = scalar_lea.vmem %s3, 8
    %v511 = vld [vmem:[%s510] sm:$0x3]
    %s512 = scalar_lea.vmem [#allocation4], 64
    %v513 = vld [vmem:[%s512] sm:$0xff]
    %v514 = vld [vmem:[%s512 + $0x8] sm:$0xff]
    %515 = vmatpush.msra.mxu0 0.0
    %516 = vmatpush.msra.mxu0 0.0
    %517 = vmatpush.msra.mxu0 0.0
    %518 = vmatpush.msra.mxu0 0.0
    %519 = vmatpush.msra.mxu0 0.0
    %520 = vmatpush.msra.mxu0 0.0
    %521 = vmatpush.msra.mxu0 0.0
    %522 = vmatpush.msra.mxu0 0.0
    %523 = vmatpush.msra.mxu0 0.0
    %524 = vmatpush.msra.mxu0 0.0
    %525 = vmatpush.msra.mxu0 0.0
    %526 = vmatpush.msra.mxu0 0.0
    %527 = vmatpush.msra.mxu0 0.0
    %528 = vmatpush.msra.mxu0 0.0
    %529 = vmatpush.msra.mxu0 %v514
    %530 = vmatpush.msra.mxu0 %v513
    %531 = vmatmul.f32.gmra.mxu0 %v68
    %v532 = vpop.f32.mrf.mxu0
    %v533 = vadd.f32 0.0, %v532
    %534 = vmatmul.f32.gmra.mxu0 %v71
    %v535 = vpop.f32.mrf.mxu0
    %v536 = vadd.f32 0.0, %v535
    %537 = vmatmul.f32.gmra.mxu0 %v74
    %v538 = vpop.f32.mrf.mxu0
    %v539 = vadd.f32 0.0, %v538
    %540 = vmatmul.f32.gmra.mxu0 %v77
    %v541 = vpop.f32.mrf.mxu0
    %v542 = vadd.f32 0.0, %v541
    %543 = vdwg.mxu0
    %v545 = vsel %vm121, %v511, 0
    %547 = vmatpush.msra.mxu0 0.0
    %548 = vmatpush.msra.mxu0 0.0
    %549 = vmatpush.msra.mxu0 0.0
    %550 = vmatpush.msra.mxu0 0.0
    %551 = vmatpush.msra.mxu0 0.0
    %552 = vmatpush.msra.mxu0 0.0
    %553 = vmatpush.msra.mxu0 0.0
    %554 = vmatpush.msra.mxu0 0.0
    %555 = vmatpush.msra.mxu0 0.0
    %556 = vmatpush.msra.mxu0 0.0
    %557 = vmatpush.msra.mxu0 0.0
    %558 = vmatpush.msra.mxu0 0.0
    %559 = vmatpush.msra.mxu0 0.0
    %560 = vmatpush.msra.mxu0 0.0
    %561 = vmatpush.msra.mxu0 0.0
    %562 = vmatpush.msra.mxu0 %v545
    %563 = vmatmul.f32.gmra.mxu0 %v110
    %v564 = vpop.f32.mrf.mxu0
    %v565 = vadd.f32 %v533, %v564
    %566 = vmatmul.f32.gmra.mxu0 %v113
    %v567 = vpop.f32.mrf.mxu0
    %v568 = vadd.f32 %v536, %v567
    %569 = vmatmul.f32.gmra.mxu0 %v116
    %v570 = vpop.f32.mrf.mxu0
    %v571 = vadd.f32 %v539, %v570
    %572 = vmatmul.f32.gmra.mxu0 %v119
    %v573 = vpop.f32.mrf.mxu0
    %v574 = vadd.f32 %v542, %v573
    %575 = vdwg.mxu0
    %s576 = scalar_lea.vmem [#allocation2], 96
    %v577 = vld [vmem:[%s576] sm:$0xff]
    %v578 = vld [vmem:[%s576 + $0x8] sm:$0xff]
    %v579 = vld [vmem:[%s576 + $0x10] sm:$0xff]
    %v580 = vld [vmem:[%s576 + $0x18] sm:$0xff]
    %v582 = vsel %vm232, %v577, 0
    %v585 = vsel %vm232, %v578, 0
    %v588 = vsel %vm232, %v579, 0
    %v591 = vsel %vm232, %v580, 0
    %593 = vmatpush.msra.mxu0 0.0
    %594 = vmatpush.msra.mxu0 0.0
    %595 = vmatpush.msra.mxu0 0.0
    %596 = vmatpush.msra.mxu0 0.0
    %597 = vmatpush.msra.mxu0 0.0
    %598 = vmatpush.msra.mxu0 0.0
    %599 = vmatpush.msra.mxu0 0.0
    %600 = vmatpush.msra.mxu0 0.0
    %601 = vmatpush.msra.mxu0 0.0
    %602 = vmatpush.msra.mxu0 0.0
    %603 = vmatpush.msra.mxu0 0.0
    %604 = vmatpush.msra.mxu0 0.0
    %605 = vmatpush.msra.mxu0 %v574
    %606 = vmatpush.msra.mxu0 %v571
    %607 = vmatpush.msra.mxu0 %v568
    %608 = vmatpush.msra.mxu0 %v565
    %609 = vmatmul.f32.gmra.mxu0 %v582
    %v610 = vpop.f32.mrf.mxu0
    %v611 = vadd.f32 0.0, %v610
    %612 = vmatmul.f32.gmra.mxu0 %v585
    %v613 = vpop.f32.mrf.mxu0
    %v614 = vadd.f32 0.0, %v613
    %615 = vmatmul.f32.gmra.mxu0 %v588
    %v616 = vpop.f32.mrf.mxu0
    %v617 = vadd.f32 0.0, %v616
    %618 = vmatmul.f32.gmra.mxu0 %v591
    %v619 = vpop.f32.mrf.mxu0
    %v620 = vadd.f32 0.0, %v619
    %621 = vdwg.mxu0
    %v622 = vadd.f32 %v506, %v611
    %v623 = vadd.f32 %v507, %v614
    %v624 = vadd.f32 %v508, %v617
    %v625 = vadd.f32 %v509, %v620
    %v626 = vxor.u32 %v622, 2147483648
    %v627 = vxor.u32 %v623, 2147483648
    %v628 = vxor.u32 %v624, 2147483648
    %v629 = vxor.u32 %v625, 2147483648
    %v630 = vmul.f32 %v626, 1.442695
    %v631 = vpow.pop %v630
    %v632 = vmul.f32 %v627, 1.442695
    %v633 = vpow.pop %v632
    %v634 = vmul.f32 %v628, 1.442695
    %v635 = vpow.pop %v634
    %v636 = vmul.f32 %v629, 1.442695
    %v637 = vpow.pop %v636
    %v638 = vadd.f32 %v631, 1.0
    %v639 = vadd.f32 %v633, 1.0
    %v640 = vadd.f32 %v635, 1.0
    %v641 = vadd.f32 %v637, 1.0
    %v642 = vrcp.pop %v638
    %v643 = vmul.f32 %v638, %v642
    %v644 = vsub.f32 1.0, %v643
    %v645 = vmul.f32 %v642, %v644
    %v646 = vadd.f32 %v642, %v645
    %vm647 = vweird.f32 %v638
    %vm648 = vweird.f32 %v642
    %vm649 = vmor %vm647, %vm648
    %v650 = vsel %vm649, %v642, %v646
    %v651 = vand.u32 2147483647, %v638
    %vm652 = vcmp.eq.f32.partialorder %v651, 8.507059e+37
    %v653 = vand.u32 %v638, 2147483648
    %v654 = vor.u32 1.1754944e-38, %v653
    %v655 = vsel %vm652, %v654, %v650
    %v656 = vmul.f32 1.0, %v655
    %v657 = vrcp.pop %v639
    %v658 = vmul.f32 %v639, %v657
    %v659 = vsub.f32 1.0, %v658
    %v660 = vmul.f32 %v657, %v659
    %v661 = vadd.f32 %v657, %v660
    %vm662 = vweird.f32 %v639
    %vm663 = vweird.f32 %v657
    %vm664 = vmor %vm662, %vm663
    %v665 = vsel %vm664, %v657, %v661
    %v666 = vand.u32 2147483647, %v639
    %vm667 = vcmp.eq.f32.partialorder %v666, 8.507059e+37
    %v668 = vand.u32 %v639, 2147483648
    %v669 = vor.u32 1.1754944e-38, %v668
    %v670 = vsel %vm667, %v669, %v665
    %v671 = vmul.f32 1.0, %v670
    %v672 = vrcp.pop %v640
    %v673 = vmul.f32 %v640, %v672
    %v674 = vsub.f32 1.0, %v673
    %v675 = vmul.f32 %v672, %v674
    %v676 = vadd.f32 %v672, %v675
    %vm677 = vweird.f32 %v640
    %vm678 = vweird.f32 %v672
    %vm679 = vmor %vm677, %vm678
    %v680 = vsel %vm679, %v672, %v676
    %v681 = vand.u32 2147483647, %v640
    %vm682 = vcmp.eq.f32.partialorder %v681, 8.507059e+37
    %v683 = vand.u32 %v640, 2147483648
    %v684 = vor.u32 1.1754944e-38, %v683
    %v685 = vsel %vm682, %v684, %v680
    %v686 = vmul.f32 1.0, %v685
    %v687 = vrcp.pop %v641
    %v688 = vmul.f32 %v641, %v687
    %v689 = vsub.f32 1.0, %v688
    %v690 = vmul.f32 %v687, %v689
    %v691 = vadd.f32 %v687, %v690
    %vm692 = vweird.f32 %v641
    %vm693 = vweird.f32 %v687
    %vm694 = vmor %vm692, %vm693
    %v695 = vsel %vm694, %v687, %v691
    %v696 = vand.u32 2147483647, %v641
    %vm697 = vcmp.eq.f32.partialorder %v696, 8.507059e+37
    %v698 = vand.u32 %v641, 2147483648
    %v699 = vor.u32 1.1754944e-38, %v698
    %v700 = vsel %vm697, %v699, %v695
    %v701 = vmul.f32 1.0, %v700
    %s702 = scalar_lea.vmem %s3, 10
    %v703 = vld [vmem:[%s702] sm:$0x3]
    %s704 = scalar_lea.vmem [#allocation4], 80
    %v705 = vld [vmem:[%s704] sm:$0xff]
    %v706 = vld [vmem:[%s704 + $0x8] sm:$0xff]
    %707 = vmatpush.msra.mxu0 0.0
    %708 = vmatpush.msra.mxu0 0.0
    %709 = vmatpush.msra.mxu0 0.0
    %710 = vmatpush.msra.mxu0 0.0
    %711 = vmatpush.msra.mxu0 0.0
    %712 = vmatpush.msra.mxu0 0.0
    %713 = vmatpush.msra.mxu0 0.0
    %714 = vmatpush.msra.mxu0 0.0
    %715 = vmatpush.msra.mxu0 0.0
    %716 = vmatpush.msra.mxu0 0.0
    %717 = vmatpush.msra.mxu0 0.0
    %718 = vmatpush.msra.mxu0 0.0
    %719 = vmatpush.msra.mxu0 0.0
    %720 = vmatpush.msra.mxu0 0.0
    %721 = vmatpush.msra.mxu0 %v706
    %722 = vmatpush.msra.mxu0 %v705
    %723 = vmatmul.f32.gmra.mxu0 %v68
    %v724 = vpop.f32.mrf.mxu0
    %v725 = vadd.f32 0.0, %v724
    %726 = vmatmul.f32.gmra.mxu0 %v71
    %v727 = vpop.f32.mrf.mxu0
    %v728 = vadd.f32 0.0, %v727
    %729 = vmatmul.f32.gmra.mxu0 %v74
    %v730 = vpop.f32.mrf.mxu0
    %v731 = vadd.f32 0.0, %v730
    %732 = vmatmul.f32.gmra.mxu0 %v77
    %v733 = vpop.f32.mrf.mxu0
    %v734 = vadd.f32 0.0, %v733
    %735 = vdwg.mxu0
    %v737 = vsel %vm121, %v703, 0
    %739 = vmatpush.msra.mxu0 0.0
    %740 = vmatpush.msra.mxu0 0.0
    %741 = vmatpush.msra.mxu0 0.0
    %742 = vmatpush.msra.mxu0 0.0
    %743 = vmatpush.msra.mxu0 0.0
    %744 = vmatpush.msra.mxu0 0.0
    %745 = vmatpush.msra.mxu0 0.0
    %746 = vmatpush.msra.mxu0 0.0
    %747 = vmatpush.msra.mxu0 0.0
    %748 = vmatpush.msra.mxu0 0.0
    %749 = vmatpush.msra.mxu0 0.0
    %750 = vmatpush.msra.mxu0 0.0
    %751 = vmatpush.msra.mxu0 0.0
    %752 = vmatpush.msra.mxu0 0.0
    %753 = vmatpush.msra.mxu0 0.0
    %754 = vmatpush.msra.mxu0 %v737
    %755 = vmatmul.f32.gmra.mxu0 %v110
    %v756 = vpop.f32.mrf.mxu0
    %v757 = vadd.f32 %v725, %v756
    %758 = vmatmul.f32.gmra.mxu0 %v113
    %v759 = vpop.f32.mrf.mxu0
    %v760 = vadd.f32 %v728, %v759
    %761 = vmatmul.f32.gmra.mxu0 %v116
    %v762 = vpop.f32.mrf.mxu0
    %v763 = vadd.f32 %v731, %v762
    %764 = vmatmul.f32.gmra.mxu0 %v119
    %v765 = vpop.f32.mrf.mxu0
    %v766 = vadd.f32 %v734, %v765
    %767 = vdwg.mxu0
    %s768 = scalar_lea.vmem %s5, 1
    %v769 = vld [vmem:[%s768] sm:$0x1]
    %v771 = vperm.slane %v769, 0
    %v773 = vadd.f32 %v757, %v771
    %v774 = vadd.f32 %v760, %v771
    %v775 = vadd.f32 %v763, %v771
    %v776 = vadd.f32 %v766, %v771
    %s777 = scalar_lea.vmem %s3, 12
    %v778 = vld [vmem:[%s777] sm:$0x3]
    %s779 = scalar_lea.vmem [#allocation4], 96
    %v780 = vld [vmem:[%s779] sm:$0xff]
    %v781 = vld [vmem:[%s779 + $0x8] sm:$0xff]
    %782 = vmatpush.msra.mxu0 0.0
    %783 = vmatpush.msra.mxu0 0.0
    %784 = vmatpush.msra.mxu0 0.0
    %785 = vmatpush.msra.mxu0 0.0
    %786 = vmatpush.msra.mxu0 0.0
    %787 = vmatpush.msra.mxu0 0.0
    %788 = vmatpush.msra.mxu0 0.0
    %789 = vmatpush.msra.mxu0 0.0
    %790 = vmatpush.msra.mxu0 0.0
    %791 = vmatpush.msra.mxu0 0.0
    %792 = vmatpush.msra.mxu0 0.0
    %793 = vmatpush.msra.mxu0 0.0
    %794 = vmatpush.msra.mxu0 0.0
    %795 = vmatpush.msra.mxu0 0.0
    %796 = vmatpush.msra.mxu0 %v781
    %797 = vmatpush.msra.mxu0 %v780
    %798 = vmatmul.f32.gmra.mxu0 %v68
    %v799 = vpop.f32.mrf.mxu0
    %v800 = vadd.f32 0.0, %v799
    %801 = vmatmul.f32.gmra.mxu0 %v71
    %v802 = vpop.f32.mrf.mxu0
    %v803 = vadd.f32 0.0, %v802
    %804 = vmatmul.f32.gmra.mxu0 %v74
    %v805 = vpop.f32.mrf.mxu0
    %v806 = vadd.f32 0.0, %v805
    %807 = vmatmul.f32.gmra.mxu0 %v77
    %v808 = vpop.f32.mrf.mxu0
    %v809 = vadd.f32 0.0, %v808
    %810 = vdwg.mxu0
    %v812 = vsel %vm121, %v778, 0
    %814 = vmatpush.msra.mxu0 0.0
    %815 = vmatpush.msra.mxu0 0.0
    %816 = vmatpush.msra.mxu0 0.0
    %817 = vmatpush.msra.mxu0 0.0
    %818 = vmatpush.msra.mxu0 0.0
    %819 = vmatpush.msra.mxu0 0.0
    %820 = vmatpush.msra.mxu0 0.0
    %821 = vmatpush.msra.mxu0 0.0
    %822 = vmatpush.msra.mxu0 0.0
    %823 = vmatpush.msra.mxu0 0.0
    %824 = vmatpush.msra.mxu0 0.0
    %825 = vmatpush.msra.mxu0 0.0
    %826 = vmatpush.msra.mxu0 0.0
    %827 = vmatpush.msra.mxu0 0.0
    %828 = vmatpush.msra.mxu0 0.0
    %829 = vmatpush.msra.mxu0 %v812
    %830 = vmatmul.f32.gmra.mxu0 %v110
    %v831 = vpop.f32.mrf.mxu0
    %v832 = vadd.f32 %v800, %v831
    %833 = vmatmul.f32.gmra.mxu0 %v113
    %v834 = vpop.f32.mrf.mxu0
    %v835 = vadd.f32 %v803, %v834
    %836 = vmatmul.f32.gmra.mxu0 %v116
    %v837 = vpop.f32.mrf.mxu0
    %v838 = vadd.f32 %v806, %v837
    %839 = vmatmul.f32.gmra.mxu0 %v119
    %v840 = vpop.f32.mrf.mxu0
    %v841 = vadd.f32 %v809, %v840
    %842 = vdwg.mxu0
    %843 = vmatpush.msra.mxu0 0.0
    %844 = vmatpush.msra.mxu0 0.0
    %845 = vmatpush.msra.mxu0 0.0
    %846 = vmatpush.msra.mxu0 0.0
    %847 = vmatpush.msra.mxu0 0.0
    %848 = vmatpush.msra.mxu0 0.0
    %849 = vmatpush.msra.mxu0 0.0
    %850 = vmatpush.msra.mxu0 0.0
    %851 = vmatpush.msra.mxu0 0.0
    %852 = vmatpush.msra.mxu0 0.0
    %853 = vmatpush.msra.mxu0 0.0
    %854 = vmatpush.msra.mxu0 0.0
    %855 = vmatpush.msra.mxu0 %v841
    %856 = vmatpush.msra.mxu0 %v838
    %857 = vmatpush.msra.mxu0 %v835
    %858 = vmatpush.msra.mxu0 %v832
    %859 = vmatmul.f32.gmra.mxu0 %v234
    %v860 = vpop.f32.mrf.mxu0
    %v861 = vadd.f32 0.0, %v860
    %862 = vmatmul.f32.gmra.mxu0 %v237
    %v863 = vpop.f32.mrf.mxu0
    %v864 = vadd.f32 0.0, %v863
    %865 = vmatmul.f32.gmra.mxu0 %v240
    %v866 = vpop.f32.mrf.mxu0
    %v867 = vadd.f32 0.0, %v866
    %868 = vmatmul.f32.gmra.mxu0 %v243
    %v869 = vpop.f32.mrf.mxu0
    %v870 = vadd.f32 0.0, %v869
    %871 = vdwg.mxu0
    %v872 = vadd.f32 %v773, %v861
    %v873 = vadd.f32 %v774, %v864
    %v874 = vadd.f32 %v775, %v867
    %v875 = vadd.f32 %v776, %v870
    %s876 = scalar_lea.vmem %s3, 14
    %v877 = vld [vmem:[%s876] sm:$0x3]
    %s878 = scalar_lea.vmem [#allocation4], 112
    %v879 = vld [vmem:[%s878] sm:$0xff]
    %v880 = vld [vmem:[%s878 + $0x8] sm:$0xff]
    %881 = vmatpush.msra.mxu0 0.0
    %882 = vmatpush.msra.mxu0 0.0
    %883 = vmatpush.msra.mxu0 0.0
    %884 = vmatpush.msra.mxu0 0.0
    %885 = vmatpush.msra.mxu0 0.0
    %886 = vmatpush.msra.mxu0 0.0
    %887 = vmatpush.msra.mxu0 0.0
    %888 = vmatpush.msra.mxu0 0.0
    %889 = vmatpush.msra.mxu0 0.0
    %890 = vmatpush.msra.mxu0 0.0
    %891 = vmatpush.msra.mxu0 0.0
    %892 = vmatpush.msra.mxu0 0.0
    %893 = vmatpush.msra.mxu0 0.0
    %894 = vmatpush.msra.mxu0 0.0
    %895 = vmatpush.msra.mxu0 %v880
    %896 = vmatpush.msra.mxu0 %v879
    %897 = vmatmul.f32.gmra.mxu0 %v68
    %v898 = vpop.f32.mrf.mxu0
    %v899 = vadd.f32 0.0, %v898
    %900 = vmatmul.f32.gmra.mxu0 %v71
    %v901 = vpop.f32.mrf.mxu0
    %v902 = vadd.f32 0.0, %v901
    %903 = vmatmul.f32.gmra.mxu0 %v74
    %v904 = vpop.f32.mrf.mxu0
    %v905 = vadd.f32 0.0, %v904
    %906 = vmatmul.f32.gmra.mxu0 %v77
    %v907 = vpop.f32.mrf.mxu0
    %v908 = vadd.f32 0.0, %v907
    %909 = vdwg.mxu0
    %v911 = vsel %vm121, %v877, 0
    %913 = vmatpush.msra.mxu0 0.0
    %914 = vmatpush.msra.mxu0 0.0
    %915 = vmatpush.msra.mxu0 0.0
    %916 = vmatpush.msra.mxu0 0.0
    %917 = vmatpush.msra.mxu0 0.0
    %918 = vmatpush.msra.mxu0 0.0
    %919 = vmatpush.msra.mxu0 0.0
    %920 = vmatpush.msra.mxu0 0.0
    %921 = vmatpush.msra.mxu0 0.0
    %922 = vmatpush.msra.mxu0 0.0
    %923 = vmatpush.msra.mxu0 0.0
    %924 = vmatpush.msra.mxu0 0.0
    %925 = vmatpush.msra.mxu0 0.0
    %926 = vmatpush.msra.mxu0 0.0
    %927 = vmatpush.msra.mxu0 0.0
    %928 = vmatpush.msra.mxu0 %v911
    %929 = vmatmul.f32.gmra.mxu0 %v110
    %v930 = vpop.f32.mrf.mxu0
    %v931 = vadd.f32 %v899, %v930
    %932 = vmatmul.f32.gmra.mxu0 %v113
    %v933 = vpop.f32.mrf.mxu0
    %v934 = vadd.f32 %v902, %v933
    %935 = vmatmul.f32.gmra.mxu0 %v116
    %v936 = vpop.f32.mrf.mxu0
    %v937 = vadd.f32 %v905, %v936
    %938 = vmatmul.f32.gmra.mxu0 %v119
    %v939 = vpop.f32.mrf.mxu0
    %v940 = vadd.f32 %v908, %v939
    %941 = vdwg.mxu0
    %942 = vmatpush.msra.mxu0 0.0
    %943 = vmatpush.msra.mxu0 0.0
    %944 = vmatpush.msra.mxu0 0.0
    %945 = vmatpush.msra.mxu0 0.0
    %946 = vmatpush.msra.mxu0 0.0
    %947 = vmatpush.msra.mxu0 0.0
    %948 = vmatpush.msra.mxu0 0.0
    %949 = vmatpush.msra.mxu0 0.0
    %950 = vmatpush.msra.mxu0 0.0
    %951 = vmatpush.msra.mxu0 0.0
    %952 = vmatpush.msra.mxu0 0.0
    %953 = vmatpush.msra.mxu0 0.0
    %954 = vmatpush.msra.mxu0 %v940
    %955 = vmatpush.msra.mxu0 %v937
    %956 = vmatpush.msra.mxu0 %v934
    %957 = vmatpush.msra.mxu0 %v931
    %958 = vmatmul.f32.gmra.mxu0 %v350
    %v959 = vpop.f32.mrf.mxu0
    %v960 = vadd.f32 0.0, %v959
    %961 = vmatmul.f32.gmra.mxu0 %v353
    %v962 = vpop.f32.mrf.mxu0
    %v963 = vadd.f32 0.0, %v962
    %964 = vmatmul.f32.gmra.mxu0 %v356
    %v965 = vpop.f32.mrf.mxu0
    %v966 = vadd.f32 0.0, %v965
    %967 = vmatmul.f32.gmra.mxu0 %v359
    %v968 = vpop.f32.mrf.mxu0
    %v969 = vadd.f32 0.0, %v968
    %970 = vdwg.mxu0
    %v971 = vadd.f32 %v872, %v960
    %v972 = vadd.f32 %v873, %v963
    %v973 = vadd.f32 %v874, %v966
    %v974 = vadd.f32 %v875, %v969
    %s975 = scalar_lea.vmem %s3, 16
    %v976 = vld [vmem:[%s975] sm:$0x3]
    %s977 = scalar_lea.vmem [#allocation4], 128
    %v978 = vld [vmem:[%s977] sm:$0xff]
    %v979 = vld [vmem:[%s977 + $0x8] sm:$0xff]
    %980 = vmatpush.msra.mxu0 0.0
    %981 = vmatpush.msra.mxu0 0.0
    %982 = vmatpush.msra.mxu0 0.0
    %983 = vmatpush.msra.mxu0 0.0
    %984 = vmatpush.msra.mxu0 0.0
    %985 = vmatpush.msra.mxu0 0.0
    %986 = vmatpush.msra.mxu0 0.0
    %987 = vmatpush.msra.mxu0 0.0
    %988 = vmatpush.msra.mxu0 0.0
    %989 = vmatpush.msra.mxu0 0.0
    %990 = vmatpush.msra.mxu0 0.0
    %991 = vmatpush.msra.mxu0 0.0
    %992 = vmatpush.msra.mxu0 0.0
    %993 = vmatpush.msra.mxu0 0.0
    %994 = vmatpush.msra.mxu0 %v979
    %995 = vmatpush.msra.mxu0 %v978
    %996 = vmatmul.f32.gmra.mxu0 %v68
    %v997 = vpop.f32.mrf.mxu0
    %v998 = vadd.f32 0.0, %v997
    %999 = vmatmul.f32.gmra.mxu0 %v71
    %v1000 = vpop.f32.mrf.mxu0
    %v1001 = vadd.f32 0.0, %v1000
    %1002 = vmatmul.f32.gmra.mxu0 %v74
    %v1003 = vpop.f32.mrf.mxu0
    %v1004 = vadd.f32 0.0, %v1003
    %1005 = vmatmul.f32.gmra.mxu0 %v77
    %v1006 = vpop.f32.mrf.mxu0
    %v1007 = vadd.f32 0.0, %v1006
    %1008 = vdwg.mxu0
    %v1010 = vsel %vm121, %v976, 0
    %1012 = vmatpush.msra.mxu0 0.0
    %1013 = vmatpush.msra.mxu0 0.0
    %1014 = vmatpush.msra.mxu0 0.0
    %1015 = vmatpush.msra.mxu0 0.0
    %1016 = vmatpush.msra.mxu0 0.0
    %1017 = vmatpush.msra.mxu0 0.0
    %1018 = vmatpush.msra.mxu0 0.0
    %1019 = vmatpush.msra.mxu0 0.0
    %1020 = vmatpush.msra.mxu0 0.0
    %1021 = vmatpush.msra.mxu0 0.0
    %1022 = vmatpush.msra.mxu0 0.0
    %1023 = vmatpush.msra.mxu0 0.0
    %1024 = vmatpush.msra.mxu0 0.0
    %1025 = vmatpush.msra.mxu0 0.0
    %1026 = vmatpush.msra.mxu0 0.0
    %1027 = vmatpush.msra.mxu0 %v1010
    %1028 = vmatmul.f32.gmra.mxu0 %v110
    %v1029 = vpop.f32.mrf.mxu0
    %v1030 = vadd.f32 %v998, %v1029
    %1031 = vmatmul.f32.gmra.mxu0 %v113
    %v1032 = vpop.f32.mrf.mxu0
    %v1033 = vadd.f32 %v1001, %v1032
    %1034 = vmatmul.f32.gmra.mxu0 %v116
    %v1035 = vpop.f32.mrf.mxu0
    %v1036 = vadd.f32 %v1004, %v1035
    %1037 = vmatmul.f32.gmra.mxu0 %v119
    %v1038 = vpop.f32.mrf.mxu0
    %v1039 = vadd.f32 %v1007, %v1038
    %1040 = vdwg.mxu0
    %1041 = vmatpush.msra.mxu0 0.0
    %1042 = vmatpush.msra.mxu0 0.0
    %1043 = vmatpush.msra.mxu0 0.0
    %1044 = vmatpush.msra.mxu0 0.0
    %1045 = vmatpush.msra.mxu0 0.0
    %1046 = vmatpush.msra.mxu0 0.0
    %1047 = vmatpush.msra.mxu0 0.0
    %1048 = vmatpush.msra.mxu0 0.0
    %1049 = vmatpush.msra.mxu0 0.0
    %1050 = vmatpush.msra.mxu0 0.0
    %1051 = vmatpush.msra.mxu0 0.0
    %1052 = vmatpush.msra.mxu0 0.0
    %1053 = vmatpush.msra.mxu0 %v1039
    %1054 = vmatpush.msra.mxu0 %v1036
    %1055 = vmatpush.msra.mxu0 %v1033
    %1056 = vmatpush.msra.mxu0 %v1030
    %1057 = vmatmul.f32.gmra.mxu0 %v466
    %v1058 = vpop.f32.mrf.mxu0
    %v1059 = vadd.f32 0.0, %v1058
    %1060 = vmatmul.f32.gmra.mxu0 %v469
    %v1061 = vpop.f32.mrf.mxu0
    %v1062 = vadd.f32 0.0, %v1061
    %1063 = vmatmul.f32.gmra.mxu0 %v472
    %v1064 = vpop.f32.mrf.mxu0
    %v1065 = vadd.f32 0.0, %v1064
    %1066 = vmatmul.f32.gmra.mxu0 %v475
    %v1067 = vpop.f32.mrf.mxu0
    %v1068 = vadd.f32 0.0, %v1067
    %1069 = vdwg.mxu0
    %v1070 = vadd.f32 %v971, %v1059
    %v1071 = vadd.f32 %v972, %v1062
    %v1072 = vadd.f32 %v973, %v1065
    %v1073 = vadd.f32 %v974, %v1068
    %s1074 = scalar_lea.vmem %s3, 18
    %v1075 = vld [vmem:[%s1074] sm:$0x3]
    %s1076 = scalar_lea.vmem [#allocation4], 144
    %v1077 = vld [vmem:[%s1076] sm:$0xff]
    %v1078 = vld [vmem:[%s1076 + $0x8] sm:$0xff]
    %1079 = vmatpush.msra.mxu0 0.0
    %1080 = vmatpush.msra.mxu0 0.0
    %1081 = vmatpush.msra.mxu0 0.0
    %1082 = vmatpush.msra.mxu0 0.0
    %1083 = vmatpush.msra.mxu0 0.0
    %1084 = vmatpush.msra.mxu0 0.0
    %1085 = vmatpush.msra.mxu0 0.0
    %1086 = vmatpush.msra.mxu0 0.0
    %1087 = vmatpush.msra.mxu0 0.0
    %1088 = vmatpush.msra.mxu0 0.0
    %1089 = vmatpush.msra.mxu0 0.0
    %1090 = vmatpush.msra.mxu0 0.0
    %1091 = vmatpush.msra.mxu0 0.0
    %1092 = vmatpush.msra.mxu0 0.0
    %1093 = vmatpush.msra.mxu0 %v1078
    %1094 = vmatpush.msra.mxu0 %v1077
    %1095 = vmatmul.f32.gmra.mxu0 %v68
    %v1096 = vpop.f32.mrf.mxu0
    %v1097 = vadd.f32 0.0, %v1096
    %1098 = vmatmul.f32.gmra.mxu0 %v71
    %v1099 = vpop.f32.mrf.mxu0
    %v1100 = vadd.f32 0.0, %v1099
    %1101 = vmatmul.f32.gmra.mxu0 %v74
    %v1102 = vpop.f32.mrf.mxu0
    %v1103 = vadd.f32 0.0, %v1102
    %1104 = vmatmul.f32.gmra.mxu0 %v77
    %v1105 = vpop.f32.mrf.mxu0
    %v1106 = vadd.f32 0.0, %v1105
    %1107 = vdwg.mxu0
    %v1109 = vsel %vm121, %v1075, 0
    %1111 = vmatpush.msra.mxu0 0.0
    %1112 = vmatpush.msra.mxu0 0.0
    %1113 = vmatpush.msra.mxu0 0.0
    %1114 = vmatpush.msra.mxu0 0.0
    %1115 = vmatpush.msra.mxu0 0.0
    %1116 = vmatpush.msra.mxu0 0.0
    %1117 = vmatpush.msra.mxu0 0.0
    %1118 = vmatpush.msra.mxu0 0.0
    %1119 = vmatpush.msra.mxu0 0.0
    %1120 = vmatpush.msra.mxu0 0.0
    %1121 = vmatpush.msra.mxu0 0.0
    %1122 = vmatpush.msra.mxu0 0.0
    %1123 = vmatpush.msra.mxu0 0.0
    %1124 = vmatpush.msra.mxu0 0.0
    %1125 = vmatpush.msra.mxu0 0.0
    %1126 = vmatpush.msra.mxu0 %v1109
    %1127 = vmatmul.f32.gmra.mxu0 %v110
    %v1128 = vpop.f32.mrf.mxu0
    %v1129 = vadd.f32 %v1097, %v1128
    %1130 = vmatmul.f32.gmra.mxu0 %v113
    %v1131 = vpop.f32.mrf.mxu0
    %v1132 = vadd.f32 %v1100, %v1131
    %1133 = vmatmul.f32.gmra.mxu0 %v116
    %v1134 = vpop.f32.mrf.mxu0
    %v1135 = vadd.f32 %v1103, %v1134
    %1136 = vmatmul.f32.gmra.mxu0 %v119
    %v1137 = vpop.f32.mrf.mxu0
    %v1138 = vadd.f32 %v1106, %v1137
    %1139 = vdwg.mxu0
    %1140 = vmatpush.msra.mxu0 0.0
    %1141 = vmatpush.msra.mxu0 0.0
    %1142 = vmatpush.msra.mxu0 0.0
    %1143 = vmatpush.msra.mxu0 0.0
    %1144 = vmatpush.msra.mxu0 0.0
    %1145 = vmatpush.msra.mxu0 0.0
    %1146 = vmatpush.msra.mxu0 0.0
    %1147 = vmatpush.msra.mxu0 0.0
    %1148 = vmatpush.msra.mxu0 0.0
    %1149 = vmatpush.msra.mxu0 0.0
    %1150 = vmatpush.msra.mxu0 0.0
    %1151 = vmatpush.msra.mxu0 0.0
    %1152 = vmatpush.msra.mxu0 %v1138
    %1153 = vmatpush.msra.mxu0 %v1135
    %1154 = vmatpush.msra.mxu0 %v1132
    %1155 = vmatpush.msra.mxu0 %v1129
    %1156 = vmatmul.f32.gmra.mxu0 %v582
    %v1157 = vpop.f32.mrf.mxu0
    %v1158 = vadd.f32 0.0, %v1157
    %1159 = vmatmul.f32.gmra.mxu0 %v585
    %v1160 = vpop.f32.mrf.mxu0
    %v1161 = vadd.f32 0.0, %v1160
    %1162 = vmatmul.f32.gmra.mxu0 %v588
    %v1163 = vpop.f32.mrf.mxu0
    %v1164 = vadd.f32 0.0, %v1163
    %1165 = vmatmul.f32.gmra.mxu0 %v591
    %v1166 = vpop.f32.mrf.mxu0
    %v1167 = vadd.f32 0.0, %v1166
    %1168 = vdwg.mxu0
    %v1169 = vadd.f32 %v1070, %v1158
    %v1170 = vadd.f32 %v1071, %v1161
    %v1171 = vadd.f32 %v1072, %v1164
    %v1172 = vadd.f32 %v1073, %v1167
    %v1173 = vxor.u32 %v1169, 2147483648
    %v1174 = vxor.u32 %v1170, 2147483648
    %v1175 = vxor.u32 %v1171, 2147483648
    %v1176 = vxor.u32 %v1172, 2147483648
    %v1177 = vmul.f32 %v1173, 1.442695
    %v1178 = vpow.pop %v1177
    %v1179 = vmul.f32 %v1174, 1.442695
    %v1180 = vpow.pop %v1179
    %v1181 = vmul.f32 %v1175, 1.442695
    %v1182 = vpow.pop %v1181
    %v1183 = vmul.f32 %v1176, 1.442695
    %v1184 = vpow.pop %v1183
    %v1185 = vadd.f32 %v1178, 1.0
    %v1186 = vadd.f32 %v1180, 1.0
    %v1187 = vadd.f32 %v1182, 1.0
    %v1188 = vadd.f32 %v1184, 1.0
    %v1189 = vrcp.pop %v1185
    %v1190 = vmul.f32 %v1185, %v1189
    %v1191 = vsub.f32 1.0, %v1190
    %v1192 = vmul.f32 %v1189, %v1191
    %v1193 = vadd.f32 %v1189, %v1192
    %vm1194 = vweird.f32 %v1185
    %vm1195 = vweird.f32 %v1189
    %vm1196 = vmor %vm1194, %vm1195
    %v1197 = vsel %vm1196, %v1189, %v1193
    %v1198 = vand.u32 2147483647, %v1185
    %vm1199 = vcmp.eq.f32.partialorder %v1198, 8.507059e+37
    %v1200 = vand.u32 %v1185, 2147483648
    %v1201 = vor.u32 1.1754944e-38, %v1200
    %v1202 = vsel %vm1199, %v1201, %v1197
    %v1203 = vmul.f32 1.0, %v1202
    %v1204 = vrcp.pop %v1186
    %v1205 = vmul.f32 %v1186, %v1204
    %v1206 = vsub.f32 1.0, %v1205
    %v1207 = vmul.f32 %v1204, %v1206
    %v1208 = vadd.f32 %v1204, %v1207
    %vm1209 = vweird.f32 %v1186
    %vm1210 = vweird.f32 %v1204
    %vm1211 = vmor %vm1209, %vm1210
    %v1212 = vsel %vm1211, %v1204, %v1208
    %v1213 = vand.u32 2147483647, %v1186
    %vm1214 = vcmp.eq.f32.partialorder %v1213, 8.507059e+37
    %v1215 = vand.u32 %v1186, 2147483648
    %v1216 = vor.u32 1.1754944e-38, %v1215
    %v1217 = vsel %vm1214, %v1216, %v1212
    %v1218 = vmul.f32 1.0, %v1217
    %v1219 = vrcp.pop %v1187
    %v1220 = vmul.f32 %v1187, %v1219
    %v1221 = vsub.f32 1.0, %v1220
    %v1222 = vmul.f32 %v1219, %v1221
    %v1223 = vadd.f32 %v1219, %v1222
    %vm1224 = vweird.f32 %v1187
    %vm1225 = vweird.f32 %v1219
    %vm1226 = vmor %vm1224, %vm1225
    %v1227 = vsel %vm1226, %v1219, %v1223
    %v1228 = vand.u32 2147483647, %v1187
    %vm1229 = vcmp.eq.f32.partialorder %v1228, 8.507059e+37
    %v1230 = vand.u32 %v1187, 2147483648
    %v1231 = vor.u32 1.1754944e-38, %v1230
    %v1232 = vsel %vm1229, %v1231, %v1227
    %v1233 = vmul.f32 1.0, %v1232
    %v1234 = vrcp.pop %v1188
    %v1235 = vmul.f32 %v1188, %v1234
    %v1236 = vsub.f32 1.0, %v1235
    %v1237 = vmul.f32 %v1234, %v1236
    %v1238 = vadd.f32 %v1234, %v1237
    %vm1239 = vweird.f32 %v1188
    %vm1240 = vweird.f32 %v1234
    %vm1241 = vmor %vm1239, %vm1240
    %v1242 = vsel %vm1241, %v1234, %v1238
    %v1243 = vand.u32 2147483647, %v1188
    %vm1244 = vcmp.eq.f32.partialorder %v1243, 8.507059e+37
    %v1245 = vand.u32 %v1188, 2147483648
    %v1246 = vor.u32 1.1754944e-38, %v1245
    %v1247 = vsel %vm1244, %v1246, %v1242
    %v1248 = vmul.f32 1.0, %v1247
    %v1249 = vmul.f32 %v656, %v59
    %v1250 = vmul.f32 %v671, %v60
    %v1251 = vmul.f32 %v686, %v61
    %v1252 = vmul.f32 %v701, %v62
    %s1253 = scalar_lea.vmem %s3, 20
    %v1254 = vld [vmem:[%s1253] sm:$0x3]
    %s1255 = scalar_lea.vmem [#allocation4], 160
    %v1256 = vld [vmem:[%s1255] sm:$0xff]
    %v1257 = vld [vmem:[%s1255 + $0x8] sm:$0xff]
    %v1259 = vsel %vm66, %v1249, 0
    %v1262 = vsel %vm66, %v1250, 0
    %v1265 = vsel %vm66, %v1251, 0
    %v1268 = vsel %vm66, %v1252, 0
    %1270 = vmatpush.msra.mxu0 0.0
    %1271 = vmatpush.msra.mxu0 0.0
    %1272 = vmatpush.msra.mxu0 0.0
    %1273 = vmatpush.msra.mxu0 0.0
    %1274 = vmatpush.msra.mxu0 0.0
    %1275 = vmatpush.msra.mxu0 0.0
    %1276 = vmatpush.msra.mxu0 0.0
    %1277 = vmatpush.msra.mxu0 0.0
    %1278 = vmatpush.msra.mxu0 0.0
    %1279 = vmatpush.msra.mxu0 0.0
    %1280 = vmatpush.msra.mxu0 0.0
    %1281 = vmatpush.msra.mxu0 0.0
    %1282 = vmatpush.msra.mxu0 0.0
    %1283 = vmatpush.msra.mxu0 0.0
    %1284 = vmatpush.msra.mxu0 %v1257
    %1285 = vmatpush.msra.mxu0 %v1256
    %1286 = vmatmul.f32.gmra.mxu0 %v1259
    %v1287 = vpop.f32.mrf.mxu0
    %v1288 = vadd.f32 0.0, %v1287
    %1289 = vmatmul.f32.gmra.mxu0 %v1262
    %v1290 = vpop.f32.mrf.mxu0
    %v1291 = vadd.f32 0.0, %v1290
    %1292 = vmatmul.f32.gmra.mxu0 %v1265
    %v1293 = vpop.f32.mrf.mxu0
    %v1294 = vadd.f32 0.0, %v1293
    %1295 = vmatmul.f32.gmra.mxu0 %v1268
    %v1296 = vpop.f32.mrf.mxu0
    %v1297 = vadd.f32 0.0, %v1296
    %1298 = vdwg.mxu0
    %v1300 = vsel %vm121, %v1254, 0
    %1302 = vmatpush.msra.mxu0 0.0
    %1303 = vmatpush.msra.mxu0 0.0
    %1304 = vmatpush.msra.mxu0 0.0
    %1305 = vmatpush.msra.mxu0 0.0
    %1306 = vmatpush.msra.mxu0 0.0
    %1307 = vmatpush.msra.mxu0 0.0
    %1308 = vmatpush.msra.mxu0 0.0
    %1309 = vmatpush.msra.mxu0 0.0
    %1310 = vmatpush.msra.mxu0 0.0
    %1311 = vmatpush.msra.mxu0 0.0
    %1312 = vmatpush.msra.mxu0 0.0
    %1313 = vmatpush.msra.mxu0 0.0
    %1314 = vmatpush.msra.mxu0 0.0
    %1315 = vmatpush.msra.mxu0 0.0
    %1316 = vmatpush.msra.mxu0 0.0
    %1317 = vmatpush.msra.mxu0 %v1300
    %1318 = vmatmul.f32.gmra.mxu0 %v110
    %v1319 = vpop.f32.mrf.mxu0
    %v1320 = vadd.f32 %v1288, %v1319
    %1321 = vmatmul.f32.gmra.mxu0 %v113
    %v1322 = vpop.f32.mrf.mxu0
    %v1323 = vadd.f32 %v1291, %v1322
    %1324 = vmatmul.f32.gmra.mxu0 %v116
    %v1325 = vpop.f32.mrf.mxu0
    %v1326 = vadd.f32 %v1294, %v1325
    %1327 = vmatmul.f32.gmra.mxu0 %v119
    %v1328 = vpop.f32.mrf.mxu0
    %v1329 = vadd.f32 %v1297, %v1328
    %1330 = vdwg.mxu0
    %s1331 = scalar_lea.vmem %s5, 2
    %v1332 = vld [vmem:[%s1331] sm:$0x1]
    %v1334 = vperm.slane %v1332, 0
    %v1336 = vadd.f32 %v1320, %v1334
    %v1337 = vadd.f32 %v1323, %v1334
    %v1338 = vadd.f32 %v1326, %v1334
    %v1339 = vadd.f32 %v1329, %v1334
    %s1340 = scalar_lea.vmem %s3, 22
    %v1341 = vld [vmem:[%s1340] sm:$0x3]
    %s1342 = scalar_lea.vmem [#allocation4], 176
    %v1343 = vld [vmem:[%s1342] sm:$0xff]
    %v1344 = vld [vmem:[%s1342 + $0x8] sm:$0xff]
    %1345 = vmatpush.msra.mxu0 0.0
    %1346 = vmatpush.msra.mxu0 0.0
    %1347 = vmatpush.msra.mxu0 0.0
    %1348 = vmatpush.msra.mxu0 0.0
    %1349 = vmatpush.msra.mxu0 0.0
    %1350 = vmatpush.msra.mxu0 0.0
    %1351 = vmatpush.msra.mxu0 0.0
    %1352 = vmatpush.msra.mxu0 0.0
    %1353 = vmatpush.msra.mxu0 0.0
    %1354 = vmatpush.msra.mxu0 0.0
    %1355 = vmatpush.msra.mxu0 0.0
    %1356 = vmatpush.msra.mxu0 0.0
    %1357 = vmatpush.msra.mxu0 0.0
    %1358 = vmatpush.msra.mxu0 0.0
    %1359 = vmatpush.msra.mxu0 %v1344
    %1360 = vmatpush.msra.mxu0 %v1343
    %1361 = vmatmul.f32.gmra.mxu0 %v1259
    %v1362 = vpop.f32.mrf.mxu0
    %v1363 = vadd.f32 0.0, %v1362
    %1364 = vmatmul.f32.gmra.mxu0 %v1262
    %v1365 = vpop.f32.mrf.mxu0
    %v1366 = vadd.f32 0.0, %v1365
    %1367 = vmatmul.f32.gmra.mxu0 %v1265
    %v1368 = vpop.f32.mrf.mxu0
    %v1369 = vadd.f32 0.0, %v1368
    %1370 = vmatmul.f32.gmra.mxu0 %v1268
    %v1371 = vpop.f32.mrf.mxu0
    %v1372 = vadd.f32 0.0, %v1371
    %1373 = vdwg.mxu0
    %v1375 = vsel %vm121, %v1341, 0
    %1377 = vmatpush.msra.mxu0 0.0
    %1378 = vmatpush.msra.mxu0 0.0
    %1379 = vmatpush.msra.mxu0 0.0
    %1380 = vmatpush.msra.mxu0 0.0
    %1381 = vmatpush.msra.mxu0 0.0
    %1382 = vmatpush.msra.mxu0 0.0
    %1383 = vmatpush.msra.mxu0 0.0
    %1384 = vmatpush.msra.mxu0 0.0
    %1385 = vmatpush.msra.mxu0 0.0
    %1386 = vmatpush.msra.mxu0 0.0
    %1387 = vmatpush.msra.mxu0 0.0
    %1388 = vmatpush.msra.mxu0 0.0
    %1389 = vmatpush.msra.mxu0 0.0
    %1390 = vmatpush.msra.mxu0 0.0
    %1391 = vmatpush.msra.mxu0 0.0
    %1392 = vmatpush.msra.mxu0 %v1375
    %1393 = vmatmul.f32.gmra.mxu0 %v110
    %v1394 = vpop.f32.mrf.mxu0
    %v1395 = vadd.f32 %v1363, %v1394
    %1396 = vmatmul.f32.gmra.mxu0 %v113
    %v1397 = vpop.f32.mrf.mxu0
    %v1398 = vadd.f32 %v1366, %v1397
    %1399 = vmatmul.f32.gmra.mxu0 %v116
    %v1400 = vpop.f32.mrf.mxu0
    %v1401 = vadd.f32 %v1369, %v1400
    %1402 = vmatmul.f32.gmra.mxu0 %v119
    %v1403 = vpop.f32.mrf.mxu0
    %v1404 = vadd.f32 %v1372, %v1403
    %1405 = vdwg.mxu0
    %1406 = vmatpush.msra.mxu0 0.0
    %1407 = vmatpush.msra.mxu0 0.0
    %1408 = vmatpush.msra.mxu0 0.0
    %1409 = vmatpush.msra.mxu0 0.0
    %1410 = vmatpush.msra.mxu0 0.0
    %1411 = vmatpush.msra.mxu0 0.0
    %1412 = vmatpush.msra.mxu0 0.0
    %1413 = vmatpush.msra.mxu0 0.0
    %1414 = vmatpush.msra.mxu0 0.0
    %1415 = vmatpush.msra.mxu0 0.0
    %1416 = vmatpush.msra.mxu0 0.0
    %1417 = vmatpush.msra.mxu0 0.0
    %1418 = vmatpush.msra.mxu0 %v1404
    %1419 = vmatpush.msra.mxu0 %v1401
    %1420 = vmatpush.msra.mxu0 %v1398
    %1421 = vmatpush.msra.mxu0 %v1395
    %1422 = vmatmul.f32.gmra.mxu0 %v234
    %v1423 = vpop.f32.mrf.mxu0
    %v1424 = vadd.f32 0.0, %v1423
    %1425 = vmatmul.f32.gmra.mxu0 %v237
    %v1426 = vpop.f32.mrf.mxu0
    %v1427 = vadd.f32 0.0, %v1426
    %1428 = vmatmul.f32.gmra.mxu0 %v240
    %v1429 = vpop.f32.mrf.mxu0
    %v1430 = vadd.f32 0.0, %v1429
    %1431 = vmatmul.f32.gmra.mxu0 %v243
    %v1432 = vpop.f32.mrf.mxu0
    %v1433 = vadd.f32 0.0, %v1432
    %1434 = vdwg.mxu0
    %v1435 = vadd.f32 %v1336, %v1424
    %v1436 = vadd.f32 %v1337, %v1427
    %v1437 = vadd.f32 %v1338, %v1430
    %v1438 = vadd.f32 %v1339, %v1433
    %s1439 = scalar_lea.vmem %s3, 24
    %v1440 = vld [vmem:[%s1439] sm:$0x3]
    %s1441 = scalar_lea.vmem [#allocation4], 192
    %v1442 = vld [vmem:[%s1441] sm:$0xff]
    %v1443 = vld [vmem:[%s1441 + $0x8] sm:$0xff]
    %1444 = vmatpush.msra.mxu0 0.0
    %1445 = vmatpush.msra.mxu0 0.0
    %1446 = vmatpush.msra.mxu0 0.0
    %1447 = vmatpush.msra.mxu0 0.0
    %1448 = vmatpush.msra.mxu0 0.0
    %1449 = vmatpush.msra.mxu0 0.0
    %1450 = vmatpush.msra.mxu0 0.0
    %1451 = vmatpush.msra.mxu0 0.0
    %1452 = vmatpush.msra.mxu0 0.0
    %1453 = vmatpush.msra.mxu0 0.0
    %1454 = vmatpush.msra.mxu0 0.0
    %1455 = vmatpush.msra.mxu0 0.0
    %1456 = vmatpush.msra.mxu0 0.0
    %1457 = vmatpush.msra.mxu0 0.0
    %1458 = vmatpush.msra.mxu0 %v1443
    %1459 = vmatpush.msra.mxu0 %v1442
    %1460 = vmatmul.f32.gmra.mxu0 %v1259
    %v1461 = vpop.f32.mrf.mxu0
    %v1462 = vadd.f32 0.0, %v1461
    %1463 = vmatmul.f32.gmra.mxu0 %v1262
    %v1464 = vpop.f32.mrf.mxu0
    %v1465 = vadd.f32 0.0, %v1464
    %1466 = vmatmul.f32.gmra.mxu0 %v1265
    %v1467 = vpop.f32.mrf.mxu0
    %v1468 = vadd.f32 0.0, %v1467
    %1469 = vmatmul.f32.gmra.mxu0 %v1268
    %v1470 = vpop.f32.mrf.mxu0
    %v1471 = vadd.f32 0.0, %v1470
    %1472 = vdwg.mxu0
    %v1474 = vsel %vm121, %v1440, 0
    %1476 = vmatpush.msra.mxu0 0.0
    %1477 = vmatpush.msra.mxu0 0.0
    %1478 = vmatpush.msra.mxu0 0.0
    %1479 = vmatpush.msra.mxu0 0.0
    %1480 = vmatpush.msra.mxu0 0.0
    %1481 = vmatpush.msra.mxu0 0.0
    %1482 = vmatpush.msra.mxu0 0.0
    %1483 = vmatpush.msra.mxu0 0.0
    %1484 = vmatpush.msra.mxu0 0.0
    %1485 = vmatpush.msra.mxu0 0.0
    %1486 = vmatpush.msra.mxu0 0.0
    %1487 = vmatpush.msra.mxu0 0.0
    %1488 = vmatpush.msra.mxu0 0.0
    %1489 = vmatpush.msra.mxu0 0.0
    %1490 = vmatpush.msra.mxu0 0.0
    %1491 = vmatpush.msra.mxu0 %v1474
    %1492 = vmatmul.f32.gmra.mxu0 %v110
    %v1493 = vpop.f32.mrf.mxu0
    %v1494 = vadd.f32 %v1462, %v1493
    %1495 = vmatmul.f32.gmra.mxu0 %v113
    %v1496 = vpop.f32.mrf.mxu0
    %v1497 = vadd.f32 %v1465, %v1496
    %1498 = vmatmul.f32.gmra.mxu0 %v116
    %v1499 = vpop.f32.mrf.mxu0
    %v1500 = vadd.f32 %v1468, %v1499
    %1501 = vmatmul.f32.gmra.mxu0 %v119
    %v1502 = vpop.f32.mrf.mxu0
    %v1503 = vadd.f32 %v1471, %v1502
    %1504 = vdwg.mxu0
    %1505 = vmatpush.msra.mxu0 0.0
    %1506 = vmatpush.msra.mxu0 0.0
    %1507 = vmatpush.msra.mxu0 0.0
    %1508 = vmatpush.msra.mxu0 0.0
    %1509 = vmatpush.msra.mxu0 0.0
    %1510 = vmatpush.msra.mxu0 0.0
    %1511 = vmatpush.msra.mxu0 0.0
    %1512 = vmatpush.msra.mxu0 0.0
    %1513 = vmatpush.msra.mxu0 0.0
    %1514 = vmatpush.msra.mxu0 0.0
    %1515 = vmatpush.msra.mxu0 0.0
    %1516 = vmatpush.msra.mxu0 0.0
    %1517 = vmatpush.msra.mxu0 %v1503
    %1518 = vmatpush.msra.mxu0 %v1500
    %1519 = vmatpush.msra.mxu0 %v1497
    %1520 = vmatpush.msra.mxu0 %v1494
    %1521 = vmatmul.f32.gmra.mxu0 %v350
    %v1522 = vpop.f32.mrf.mxu0
    %v1523 = vadd.f32 0.0, %v1522
    %1524 = vmatmul.f32.gmra.mxu0 %v353
    %v1525 = vpop.f32.mrf.mxu0
    %v1526 = vadd.f32 0.0, %v1525
    %1527 = vmatmul.f32.gmra.mxu0 %v356
    %v1528 = vpop.f32.mrf.mxu0
    %v1529 = vadd.f32 0.0, %v1528
    %1530 = vmatmul.f32.gmra.mxu0 %v359
    %v1531 = vpop.f32.mrf.mxu0
    %v1532 = vadd.f32 0.0, %v1531
    %1533 = vdwg.mxu0
    %v1534 = vadd.f32 %v1435, %v1523
    %v1535 = vadd.f32 %v1436, %v1526
    %v1536 = vadd.f32 %v1437, %v1529
    %v1537 = vadd.f32 %v1438, %v1532
    %s1538 = scalar_lea.vmem %s3, 26
    %v1539 = vld [vmem:[%s1538] sm:$0x3]
    %s1540 = scalar_lea.vmem [#allocation4], 208
    %v1541 = vld [vmem:[%s1540] sm:$0xff]
    %v1542 = vld [vmem:[%s1540 + $0x8] sm:$0xff]
    %1543 = vmatpush.msra.mxu0 0.0
    %1544 = vmatpush.msra.mxu0 0.0
    %1545 = vmatpush.msra.mxu0 0.0
    %1546 = vmatpush.msra.mxu0 0.0
    %1547 = vmatpush.msra.mxu0 0.0
    %1548 = vmatpush.msra.mxu0 0.0
    %1549 = vmatpush.msra.mxu0 0.0
    %1550 = vmatpush.msra.mxu0 0.0
    %1551 = vmatpush.msra.mxu0 0.0
    %1552 = vmatpush.msra.mxu0 0.0
    %1553 = vmatpush.msra.mxu0 0.0
    %1554 = vmatpush.msra.mxu0 0.0
    %1555 = vmatpush.msra.mxu0 0.0
    %1556 = vmatpush.msra.mxu0 0.0
    %1557 = vmatpush.msra.mxu0 %v1542
    %1558 = vmatpush.msra.mxu0 %v1541
    %1559 = vmatmul.f32.gmra.mxu0 %v1259
    %v1560 = vpop.f32.mrf.mxu0
    %v1561 = vadd.f32 0.0, %v1560
    %1562 = vmatmul.f32.gmra.mxu0 %v1262
    %v1563 = vpop.f32.mrf.mxu0
    %v1564 = vadd.f32 0.0, %v1563
    %1565 = vmatmul.f32.gmra.mxu0 %v1265
    %v1566 = vpop.f32.mrf.mxu0
    %v1567 = vadd.f32 0.0, %v1566
    %1568 = vmatmul.f32.gmra.mxu0 %v1268
    %v1569 = vpop.f32.mrf.mxu0
    %v1570 = vadd.f32 0.0, %v1569
    %1571 = vdwg.mxu0
    %v1573 = vsel %vm121, %v1539, 0
    %1575 = vmatpush.msra.mxu0 0.0
    %1576 = vmatpush.msra.mxu0 0.0
    %1577 = vmatpush.msra.mxu0 0.0
    %1578 = vmatpush.msra.mxu0 0.0
    %1579 = vmatpush.msra.mxu0 0.0
    %1580 = vmatpush.msra.mxu0 0.0
    %1581 = vmatpush.msra.mxu0 0.0
    %1582 = vmatpush.msra.mxu0 0.0
    %1583 = vmatpush.msra.mxu0 0.0
    %1584 = vmatpush.msra.mxu0 0.0
    %1585 = vmatpush.msra.mxu0 0.0
    %1586 = vmatpush.msra.mxu0 0.0
    %1587 = vmatpush.msra.mxu0 0.0
    %1588 = vmatpush.msra.mxu0 0.0
    %1589 = vmatpush.msra.mxu0 0.0
    %1590 = vmatpush.msra.mxu0 %v1573
    %1591 = vmatmul.f32.gmra.mxu0 %v110
    %v1592 = vpop.f32.mrf.mxu0
    %v1593 = vadd.f32 %v1561, %v1592
    %1594 = vmatmul.f32.gmra.mxu0 %v113
    %v1595 = vpop.f32.mrf.mxu0
    %v1596 = vadd.f32 %v1564, %v1595
    %1597 = vmatmul.f32.gmra.mxu0 %v116
    %v1598 = vpop.f32.mrf.mxu0
    %v1599 = vadd.f32 %v1567, %v1598
    %1600 = vmatmul.f32.gmra.mxu0 %v119
    %v1601 = vpop.f32.mrf.mxu0
    %v1602 = vadd.f32 %v1570, %v1601
    %1603 = vdwg.mxu0
    %1604 = vmatpush.msra.mxu0 0.0
    %1605 = vmatpush.msra.mxu0 0.0
    %1606 = vmatpush.msra.mxu0 0.0
    %1607 = vmatpush.msra.mxu0 0.0
    %1608 = vmatpush.msra.mxu0 0.0
    %1609 = vmatpush.msra.mxu0 0.0
    %1610 = vmatpush.msra.mxu0 0.0
    %1611 = vmatpush.msra.mxu0 0.0
    %1612 = vmatpush.msra.mxu0 0.0
    %1613 = vmatpush.msra.mxu0 0.0
    %1614 = vmatpush.msra.mxu0 0.0
    %1615 = vmatpush.msra.mxu0 0.0
    %1616 = vmatpush.msra.mxu0 %v1602
    %1617 = vmatpush.msra.mxu0 %v1599
    %1618 = vmatpush.msra.mxu0 %v1596
    %1619 = vmatpush.msra.mxu0 %v1593
    %1620 = vmatmul.f32.gmra.mxu0 %v466
    %v1621 = vpop.f32.mrf.mxu0
    %v1622 = vadd.f32 0.0, %v1621
    %1623 = vmatmul.f32.gmra.mxu0 %v469
    %v1624 = vpop.f32.mrf.mxu0
    %v1625 = vadd.f32 0.0, %v1624
    %1626 = vmatmul.f32.gmra.mxu0 %v472
    %v1627 = vpop.f32.mrf.mxu0
    %v1628 = vadd.f32 0.0, %v1627
    %1629 = vmatmul.f32.gmra.mxu0 %v475
    %v1630 = vpop.f32.mrf.mxu0
    %v1631 = vadd.f32 0.0, %v1630
    %1632 = vdwg.mxu0
    %v1633 = vadd.f32 %v1534, %v1622
    %v1634 = vadd.f32 %v1535, %v1625
    %v1635 = vadd.f32 %v1536, %v1628
    %v1636 = vadd.f32 %v1537, %v1631
    %s1637 = scalar_lea.vmem %s3, 28
    %v1638 = vld [vmem:[%s1637] sm:$0x3]
    %s1639 = scalar_lea.vmem [#allocation4], 224
    %v1640 = vld [vmem:[%s1639] sm:$0xff]
    %v1641 = vld [vmem:[%s1639 + $0x8] sm:$0xff]
    %1642 = vmatpush.msra.mxu0 0.0
    %1643 = vmatpush.msra.mxu0 0.0
    %1644 = vmatpush.msra.mxu0 0.0
    %1645 = vmatpush.msra.mxu0 0.0
    %1646 = vmatpush.msra.mxu0 0.0
    %1647 = vmatpush.msra.mxu0 0.0
    %1648 = vmatpush.msra.mxu0 0.0
    %1649 = vmatpush.msra.mxu0 0.0
    %1650 = vmatpush.msra.mxu0 0.0
    %1651 = vmatpush.msra.mxu0 0.0
    %1652 = vmatpush.msra.mxu0 0.0
    %1653 = vmatpush.msra.mxu0 0.0
    %1654 = vmatpush.msra.mxu0 0.0
    %1655 = vmatpush.msra.mxu0 0.0
    %1656 = vmatpush.msra.mxu0 %v1641
    %1657 = vmatpush.msra.mxu0 %v1640
    %1658 = vmatmul.f32.gmra.mxu0 %v1259
    %v1659 = vpop.f32.mrf.mxu0
    %v1660 = vadd.f32 0.0, %v1659
    %1661 = vmatmul.f32.gmra.mxu0 %v1262
    %v1662 = vpop.f32.mrf.mxu0
    %v1663 = vadd.f32 0.0, %v1662
    %1664 = vmatmul.f32.gmra.mxu0 %v1265
    %v1665 = vpop.f32.mrf.mxu0
    %v1666 = vadd.f32 0.0, %v1665
    %1667 = vmatmul.f32.gmra.mxu0 %v1268
    %v1668 = vpop.f32.mrf.mxu0
    %v1669 = vadd.f32 0.0, %v1668
    %1670 = vdwg.mxu0
    %v1672 = vsel %vm121, %v1638, 0
    %1674 = vmatpush.msra.mxu0 0.0
    %1675 = vmatpush.msra.mxu0 0.0
    %1676 = vmatpush.msra.mxu0 0.0
    %1677 = vmatpush.msra.mxu0 0.0
    %1678 = vmatpush.msra.mxu0 0.0
    %1679 = vmatpush.msra.mxu0 0.0
    %1680 = vmatpush.msra.mxu0 0.0
    %1681 = vmatpush.msra.mxu0 0.0
    %1682 = vmatpush.msra.mxu0 0.0
    %1683 = vmatpush.msra.mxu0 0.0
    %1684 = vmatpush.msra.mxu0 0.0
    %1685 = vmatpush.msra.mxu0 0.0
    %1686 = vmatpush.msra.mxu0 0.0
    %1687 = vmatpush.msra.mxu0 0.0
    %1688 = vmatpush.msra.mxu0 0.0
    %1689 = vmatpush.msra.mxu0 %v1672
    %1690 = vmatmul.f32.gmra.mxu0 %v110
    %v1691 = vpop.f32.mrf.mxu0
    %v1692 = vadd.f32 %v1660, %v1691
    %1693 = vmatmul.f32.gmra.mxu0 %v113
    %v1694 = vpop.f32.mrf.mxu0
    %v1695 = vadd.f32 %v1663, %v1694
    %1696 = vmatmul.f32.gmra.mxu0 %v116
    %v1697 = vpop.f32.mrf.mxu0
    %v1698 = vadd.f32 %v1666, %v1697
    %1699 = vmatmul.f32.gmra.mxu0 %v119
    %v1700 = vpop.f32.mrf.mxu0
    %v1701 = vadd.f32 %v1669, %v1700
    %1702 = vdwg.mxu0
    %1703 = vmatpush.msra.mxu0 0.0
    %1704 = vmatpush.msra.mxu0 0.0
    %1705 = vmatpush.msra.mxu0 0.0
    %1706 = vmatpush.msra.mxu0 0.0
    %1707 = vmatpush.msra.mxu0 0.0
    %1708 = vmatpush.msra.mxu0 0.0
    %1709 = vmatpush.msra.mxu0 0.0
    %1710 = vmatpush.msra.mxu0 0.0
    %1711 = vmatpush.msra.mxu0 0.0
    %1712 = vmatpush.msra.mxu0 0.0
    %1713 = vmatpush.msra.mxu0 0.0
    %1714 = vmatpush.msra.mxu0 0.0
    %1715 = vmatpush.msra.mxu0 %v1701
    %1716 = vmatpush.msra.mxu0 %v1698
    %1717 = vmatpush.msra.mxu0 %v1695
    %1718 = vmatpush.msra.mxu0 %v1692
    %1719 = vmatmul.f32.gmra.mxu0 %v582
    %v1720 = vpop.f32.mrf.mxu0
    %v1721 = vadd.f32 0.0, %v1720
    %1722 = vmatmul.f32.gmra.mxu0 %v585
    %v1723 = vpop.f32.mrf.mxu0
    %v1724 = vadd.f32 0.0, %v1723
    %1725 = vmatmul.f32.gmra.mxu0 %v588
    %v1726 = vpop.f32.mrf.mxu0
    %v1727 = vadd.f32 0.0, %v1726
    %1728 = vmatmul.f32.gmra.mxu0 %v591
    %v1729 = vpop.f32.mrf.mxu0
    %v1730 = vadd.f32 0.0, %v1729
    %1731 = vdwg.mxu0
    %v1732 = vadd.f32 %v1633, %v1721
    %v1733 = vadd.f32 %v1634, %v1724
    %v1734 = vadd.f32 %v1635, %v1727
    %v1735 = vadd.f32 %v1636, %v1730
    %v1736 = vtanh.pop %v1732
    %v1737 = vtanh.pop %v1733
    %v1738 = vtanh.pop %v1734
    %v1739 = vtanh.pop %v1735
    %v1740 = vmul.f32 %v1203, %v59
    %v1741 = vmul.f32 %v1218, %v60
    %v1742 = vmul.f32 %v1233, %v61
    %v1743 = vmul.f32 %v1248, %v62
    %v1744 = vsub.f32 1.0, %v1203
    %v1745 = vsub.f32 1.0, %v1218
    %v1746 = vsub.f32 1.0, %v1233
    %v1747 = vsub.f32 1.0, %v1248
    %v1748 = vmul.f32 %v1744, %v1736
    %v1749 = vmul.f32 %v1745, %v1737
    %v1750 = vmul.f32 %v1746, %v1738
    %v1751 = vmul.f32 %v1747, %v1739
    %v1752 = vadd.f32 %v1740, %v1748
    %v1753 = vadd.f32 %v1741, %v1749
    %v1754 = vadd.f32 %v1742, %v1750
    %v1755 = vadd.f32 %v1743, %v1751
    %1756 = vst.msk [vmem:[%s6] sm:$0xff] %vm66, %v1752
    %1757 = vst.msk [vmem:[%s6 + $0x8] sm:$0xff] %vm66, %v1753
    %1758 = vst.msk [vmem:[%s6 + $0x10] sm:$0xff] %vm66, %v1754
    %1759 = vst.msk [vmem:[%s6 + $0x18] sm:$0xff] %vm66, %v1755
    // Predicated region
    $region34: #{tpu_custom_call.1} parent=1 // pred_check
      _
    $region35: #{tpu_custom_call.1} parent=1 // pred_check_branch
      %1761 = sbr.rel (0) target = $region37
    $region36: #{tpu_custom_call.1} parent=1 // pred_region
      _
    $region37: #{tpu_custom_call.1} parent=1 // pred_fallthru
      _
    // Predicated region
    $region38: #{tpu_custom_call.1} parent=1 // pred_check
      _
    $region39: #{tpu_custom_call.1} parent=1 // pred_check_branch
      %1763 = sbr.rel (0) target = $region41
    $region40: #{tpu_custom_call.1} parent=1 // pred_region
      _
    $region41: #{tpu_custom_call.1} parent=1 // pred_fallthru
      _
    %1764 = vsyncpa [#allocation3], 1
    %1765 = vsyncpa [#allocation5], 1

</llo_original>
